<compile_context>
chip_gen: v7x
topology: tpu7x:2x2x1
jax: 0.10.0
libtpu: 0.0.40
codegen_flags: <defaults>
</compile_context>

<pallas_src>
import jax
import jax.numpy as jnp
from jax.experimental import pallas as pl
from jax.experimental.pallas import tpu as pltpu


DISEASE_DIM, PHENO_DIM, SUBCELL_DIM = 32, 16, 16
NUM_DISEASES, NUM_PHENOS, NUM_SUBCELL = 200, 220, 30   # small synthetic vocabularies
HIDDEN1, HIDDEN2 = 128, 64
COMBINED_DIM = (DISEASE_DIM + PHENO_DIM + SUBCELL_DIM) * 2   # 128 (forward semantics)


# -----------------------------------------------------------------------------
# Fused Pallas kernel
# -----------------------------------------------------------------------------
def _make_fused_kernel(B, s_dis, s_phe, s_sub):
    N = 2 * B  # compound + protein stacked

    def kernel(idx_d_ref, idx_p_ref, idx_s_ref,
               tab_d_ref, tab_p_ref, tab_s_ref,
               wd1_ref, bd1_ref, wd2_ref,
               wp1_ref, bp1_ref, wp2_ref,
               ws1_ref, bs1_ref, ws2_ref,
               wf1_ref, bf1_ref, wf2_ref, bf2_ref, wf3_ref, bf3_ref,
               o_ref, feat_ref):

        def attend(idx_ref, tab_ref, w1_ref, b1_ref, w2_ref, S):
            """Gather + attention for all 2B examples of one field.  -> (2B, D)."""
            NS = N * S
            tab = tab_ref[...]                                   # (V, D)
            V = tab.shape[0]
            idx = idx_ref[...]                                   # (NS, 1) int32
            # One-hot gather on the MXU (tables are VMEM resident).
            lane = jax.lax.broadcasted_iota(jnp.int32, (NS, V), 1)
            onehot = (lane == idx).astype(jnp.float32)           # (NS, V)
            x = jnp.dot(onehot, tab, preferred_element_type=jnp.float32)   # (NS, D)
            # First projection + tanh: one batched matmul for all 2B*S rows.
            h = jnp.tanh(jnp.dot(x, w1_ref[...],
                                 preferred_element_type=jnp.float32) + b1_ref[...])
            # Score on the VPU (single output column); b2 dropped — a constant
            # per-example offset cancels exactly in softmax.
            s = jnp.sum(h * w2_ref[...], axis=-1, keepdims=True)            # (NS, 1)
            # Softmax over each example's S rows, batched via a segment matrix.
            # Global max subtraction is valid (per-example shift invariance);
            # scores are tanh-bounded so there is no over/underflow risk.
            e = jnp.exp(s - jnp.max(s, axis=0, keepdims=True))              # (NS, 1)
            seg_n = jax.lax.broadcasted_iota(jnp.int32, (N, NS), 0)
            seg_j = jax.lax.broadcasted_iota(jnp.int32, (N, NS), 1)
            segT = ((seg_j >= seg_n * S) & (seg_j < seg_n * S + S)).astype(jnp.float32)
            num = jnp.dot(segT, x * e, preferred_element_type=jnp.float32)  # (N, D)
            den = jnp.dot(segT, e, preferred_element_type=jnp.float32)      # (N, 1)
            # Divide via EUP reciprocal (separate issue slot from the VALU).
            return num * pl.reciprocal(den, approx=True)                    # (N, D)

        ad = attend(idx_d_ref, tab_d_ref, wd1_ref, bd1_ref, wd2_ref, s_dis)   # (2B, 32)
        ap = attend(idx_p_ref, tab_p_ref, wp1_ref, bp1_ref, wp2_ref, s_phe)   # (2B, 16)
        asb = attend(idx_s_ref, tab_s_ref, ws1_ref, bs1_ref, ws2_ref, s_sub)  # (2B, 16)

        # Lane-dense (B, 128) combined-feature slab, laid out in fc1 concat
        # order: [compound: dis|phe|sub  |  protein: dis|phe|sub]
        feat_ref[:, 0:32] = ad[:B]
        feat_ref[:, 32:48] = ap[:B]
        feat_ref[:, 48:64] = asb[:B]
        feat_ref[:, 64:96] = ad[B:]
        feat_ref[:, 96:112] = ap[B:]
        feat_ref[:, 112:128] = asb[B:]

        # MLP head: fc1 -> LeakyReLU -> (dropout = identity, eval) -> fc2 ->
        # LeakyReLU -> fc3 -> sigmoid.
        xc = feat_ref[...]                                                   # (B, 128)
        h1 = jnp.dot(xc, wf1_ref[...], preferred_element_type=jnp.float32) + bf1_ref[...]
        h1 = jnp.where(h1 >= 0, h1, 0.01 * h1)
        # TODO(synk): dropout is identity (inference mode); training-mode dropout
        # would need pltpu.prng_* and a training flag.
        h2 = jnp.dot(h1, wf2_ref[...], preferred_element_type=jnp.float32) + bf2_ref[...]
        h2 = jnp.where(h2 >= 0, h2, 0.01 * h2)
        # fc3 has a single output column -> VPU multiply-reduce, bias from SMEM.
        h3 = jnp.sum(h2 * wf3_ref[...], axis=-1, keepdims=True) + bf3_ref[0]
        # sigmoid: exp on EUP, divide via EUP reciprocal.
        o_ref[...] = pl.reciprocal(1.0 + jnp.exp(-h3), approx=True)

    return kernel


def forward(params, c_dis, c_phe, c_sub, p_dis, p_phe, p_sub):
    B, s_dis = c_dis.shape
    s_phe = c_phe.shape[1]
    s_sub = c_sub.shape[1]
    N = 2 * B

    # Stack compound + protein (they share tables and attention weights) and
    # flatten indices to (2B*S, 1) -- trivial int32 glue, no HBM-sized tensors.
    idx_d = jnp.concatenate([c_dis, p_dis], axis=0).reshape(N * s_dis, 1).astype(jnp.int32)
    idx_p = jnp.concatenate([c_phe, p_phe], axis=0).reshape(N * s_phe, 1).astype(jnp.int32)
    idx_s = jnp.concatenate([c_sub, p_sub], axis=0).reshape(N * s_sub, 1).astype(jnp.int32)

    wd1, bd1, wd2, _ = params["disease_attn"]
    wp1, bp1, wp2, _ = params["pheno_attn"]
    ws1, bs1, ws2, _ = params["subcell_attn"]
    wf1, bf1 = params["fc1"]
    wf2, bf2 = params["fc2"]
    wf3, bf3 = params["fc3"]

    vmem = pl.BlockSpec(memory_space=pltpu.MemorySpace.VMEM)
    smem = pl.BlockSpec(memory_space=pltpu.MemorySpace.SMEM)

    kernel = _make_fused_kernel(B, s_dis, s_phe, s_sub)
    return pl.pallas_call(
        kernel,
        out_shape=jax.ShapeDtypeStruct((B, 1), jnp.float32),
        in_specs=[vmem] * 20 + [smem],        # last input (fc3 bias scalar) -> SMEM
        out_specs=vmem,
        scratch_shapes=[pltpu.VMEM((B, COMBINED_DIM), jnp.float32)],
    )(idx_d, idx_p, idx_s,
      params["disease_emb"], params["pheno_emb"], params["subcell_emb"],
      wd1, bd1, wd2, wp1, bp1, wp2, ws1, bs1, ws2,
      wf1, bf1, wf2, bf2, wf3, bf3)


# -----------------------------------------------------------------------------
# Parameter init (deterministic, synthetic)
# -----------------------------------------------------------------------------
def _uniform(key, shape, bound):
    return jax.random.uniform(key, shape, jnp.float32, -bound, bound)


def _linear_t(key, fan_in, fan_out):
    """nn.Linear(fan_in, fan_out): weight stored (in, out), bias (1, out)."""
    kw, kb = jax.random.split(key)
    s = 1.0 / (fan_in ** 0.5)
    return _uniform(kw, (fan_in, fan_out), s), _uniform(kb, (1, fan_out), s)


def _linear_row(key, fan_in):
    """nn.Linear(fan_in, 1): weight stored (1, fan_in) (PyTorch layout), bias (1,)."""
    kw, kb = jax.random.split(key)
    s = 1.0 / (fan_in ** 0.5)
    return _uniform(kw, (1, fan_in), s), _uniform(kb, (1,), s)


def init_params(key):
    ks = jax.random.split(key, 16)
    p = {}
    p["disease_emb"] = 0.1 * jax.random.normal(ks[0], (NUM_DISEASES, DISEASE_DIM), jnp.float32)
    p["pheno_emb"] = 0.1 * jax.random.normal(ks[1], (NUM_PHENOS, PHENO_DIM), jnp.float32)
    p["subcell_emb"] = 0.1 * jax.random.normal(ks[2], (NUM_SUBCELL, SUBCELL_DIM), jnp.float32)

    def attn_params(k, d):
        k1, k2 = jax.random.split(k)
        w1, b1 = _linear_t(k1, d, d // 2)
        w2, b2 = _linear_row(k2, d // 2)
        return (w1, b1, w2, b2)

    p["disease_attn"] = attn_params(ks[3], DISEASE_DIM)
    p["pheno_attn"] = attn_params(ks[4], PHENO_DIM)
    p["subcell_attn"] = attn_params(ks[5], SUBCELL_DIM)

    p["fc1"] = _linear_t(ks[6], COMBINED_DIM, HIDDEN1)
    p["fc2"] = _linear_t(ks[7], HIDDEN1, HIDDEN2)
    p["fc3"] = _linear_row(ks[8], HIDDEN2)
    return p


# -----------------------------------------------------------------------------
# Pure-JAX reference (mirrors the PyTorch forward, incl. the softmax-no-op b2)
# -----------------------------------------------------------------------------
def forward_ref(params, c_dis, c_phe, c_sub, p_dis, p_phe, p_sub):
    def attn_ref(x, w1, b1, w2, b2):
        h = jnp.tanh(x @ w1 + b1)                                   # (B, S, H)
        s = jnp.sum(h * w2, axis=-1, keepdims=True) + b2[0]         # (B, S, 1)
        a = jax.nn.softmax(s, axis=1)
        return jnp.sum(x * a, axis=1)                               # (B, D)

    def attend(table, attn_p, idx):
        return attn_ref(table[idx], *attn_p)

    cd = attend(params["disease_emb"], params["disease_attn"], c_dis)
    cp = attend(params["pheno_emb"], params["pheno_attn"], c_phe)
    cs = attend(params["subcell_emb"], params["subcell_attn"], c_sub)
    pd = attend(params["disease_emb"], params["disease_attn"], p_dis)
    pp = attend(params["pheno_emb"], params["pheno_attn"], p_phe)
    ps = attend(params["subcell_emb"], params["subcell_attn"], p_sub)
    combined = jnp.concatenate([cd, cp, cs, pd, pp, ps], axis=1)    # (B, 128)

    def lrelu(x):
        return jnp.where(x >= 0, x, 0.01 * x)

    (w1, b1), (w2, b2), (w3, b3) = params["fc1"], params["fc2"], params["fc3"]
    x = lrelu(combined @ w1 + b1)
    x = lrelu(x @ w2 + b2)
    x = jnp.sum(x * w3, axis=-1, keepdims=True) + b3[0]
    return jax.nn.sigmoid(x)


# -----------------------------------------------------------------------------
if __name__ == "__main__":
    key = jax.random.PRNGKey(0)
    k_param, k_in = jax.random.split(key)
    params = init_params(k_param)

    B, S_DIS, S_PHE, S_SUB = 2, 8, 8, 4
    kk = jax.random.split(k_in, 6)
    c_dis = jax.random.randint(kk[0], (B, S_DIS), 0, NUM_DISEASES, jnp.int32)
    c_phe = jax.random.randint(kk[1], (B, S_PHE), 0, NUM_PHENOS, jnp.int32)
    c_sub = jax.random.randint(kk[2], (B, S_SUB), 0, NUM_SUBCELL, jnp.int32)
    p_dis = jax.random.randint(kk[3], (B, S_DIS), 0, NUM_DISEASES, jnp.int32)
    p_phe = jax.random.randint(kk[4], (B, S_PHE), 0, NUM_PHENOS, jnp.int32)
    p_sub = jax.random.randint(kk[5], (B, S_SUB), 0, NUM_SUBCELL, jnp.int32)

    out = forward(params, c_dis, c_phe, c_sub, p_dis, p_phe, p_sub)
    out = jax.block_until_ready(out)

    ref = forward_ref(params, c_dis, c_phe, c_sub, p_dis, p_phe, p_sub)
    ref = jax.block_until_ready(ref)

    assert out.shape == (B, 1), out.shape
    assert jnp.allclose(out, ref, rtol=5e-3, atol=5e-3), (out, ref)
    print("KERNEL_OK")
</pallas_src>

<mosaic_0001>
module attributes {stable_mosaic.version = 11 : i64} {
  func.func @kernel(%arg0: memref<32x1xi32, #tpu.memory_space<vmem>>, %arg1: memref<32x1xi32, #tpu.memory_space<vmem>>, %arg2: memref<16x1xi32, #tpu.memory_space<vmem>>, %arg3: memref<200x32xf32, #tpu.memory_space<vmem>>, %arg4: memref<220x16xf32, #tpu.memory_space<vmem>>, %arg5: memref<30x16xf32, #tpu.memory_space<vmem>>, %arg6: memref<32x16xf32, #tpu.memory_space<vmem>>, %arg7: memref<1x16xf32, #tpu.memory_space<vmem>>, %arg8: memref<1x16xf32, #tpu.memory_space<vmem>>, %arg9: memref<16x8xf32, #tpu.memory_space<vmem>>, %arg10: memref<1x8xf32, #tpu.memory_space<vmem>>, %arg11: memref<1x8xf32, #tpu.memory_space<vmem>>, %arg12: memref<16x8xf32, #tpu.memory_space<vmem>>, %arg13: memref<1x8xf32, #tpu.memory_space<vmem>>, %arg14: memref<1x8xf32, #tpu.memory_space<vmem>>, %arg15: memref<128x128xf32, #tpu.memory_space<vmem>>, %arg16: memref<1x128xf32, #tpu.memory_space<vmem>>, %arg17: memref<128x64xf32, #tpu.memory_space<vmem>>, %arg18: memref<1x64xf32, #tpu.memory_space<vmem>>, %arg19: memref<1x64xf32, #tpu.memory_space<vmem>>, %arg20: memref<1xf32, #tpu.memory_space<smem>>, %arg21: memref<2x1xf32, #tpu.memory_space<vmem>>, %arg22: memref<2x128xf32, #tpu.memory_space<vmem>>) attributes {dimension_semantics = [], scalar_prefetch = 0 : i64, scratch_operands = 1 : i64, tpu.core_type = #tpu.core_type<tc>} {
    %c0 = arith.constant 0 : index
    %c0_0 = arith.constant 0 : index
    %0 = vector.load %arg3[%c0, %c0_0] : memref<200x32xf32, #tpu.memory_space<vmem>>, vector<200x32xf32>
    %c0_1 = arith.constant 0 : index
    %c0_2 = arith.constant 0 : index
    %1 = vector.load %arg0[%c0_1, %c0_2] : memref<32x1xi32, #tpu.memory_space<vmem>>, vector<32x1xi32>
    %2 = tpu.iota {dimensions = array<i32: 1>} : vector<32x200xi32>
    %3 = vector.broadcast %1 : vector<32x1xi32> to vector<32x200xi32>
    %4 = arith.cmpi eq, %2, %3 : vector<32x200xi32>
    %5 = arith.extui %4 : vector<32x200xi1> to vector<32x200xi32>
    %6 = arith.sitofp %5 : vector<32x200xi32> to vector<32x200xf32>
    %cst = arith.constant dense<0.000000e+00> : vector<32x32xf32>
    %7 = tpu.matmul %6, %0, %cst {dimension_numbers = #tpu.dot_dimension_numbers<[1], [0], [0], [1], [0, 0, 1, 1], [], []>} : vector<32x200xf32>, vector<200x32xf32>, vector<32x32xf32> -> vector<32x32xf32>
    %c0_3 = arith.constant 0 : index
    %c0_4 = arith.constant 0 : index
    %8 = vector.load %arg6[%c0_3, %c0_4] : memref<32x16xf32, #tpu.memory_space<vmem>>, vector<32x16xf32>
    %cst_5 = arith.constant dense<0.000000e+00> : vector<32x16xf32>
    %9 = tpu.matmul %7, %8, %cst_5 {dimension_numbers = #tpu.dot_dimension_numbers<[1], [0], [0], [1], [0, 0, 1, 1], [], []>} : vector<32x32xf32>, vector<32x16xf32>, vector<32x16xf32> -> vector<32x16xf32>
    %c0_6 = arith.constant 0 : index
    %c0_7 = arith.constant 0 : index
    %10 = vector.load %arg7[%c0_6, %c0_7] : memref<1x16xf32, #tpu.memory_space<vmem>>, vector<1x16xf32>
    %11 = vector.broadcast %10 : vector<1x16xf32> to vector<32x16xf32>
    %12 = arith.addf %9, %11 : vector<32x16xf32>
    %13 = math.tanh %12 : vector<32x16xf32>
    %c0_8 = arith.constant 0 : index
    %c0_9 = arith.constant 0 : index
    %14 = vector.load %arg8[%c0_8, %c0_9] : memref<1x16xf32, #tpu.memory_space<vmem>>, vector<1x16xf32>
    %15 = vector.broadcast %14 : vector<1x16xf32> to vector<32x16xf32>
    %16 = arith.mulf %13, %15 : vector<32x16xf32>
    %cst_10 = arith.constant dense<0.000000e+00> : vector<32xf32>
    %17 = vector.multi_reduction <add>, %16, %cst_10 [1] : vector<32x16xf32> to vector<32xf32>
    %18 = vector.shape_cast %17 : vector<32xf32> to vector<32x1xf32>
    %cst_11 = arith.constant dense<0xFF800000> : vector<1xf32>
    %19 = vector.multi_reduction <maximumf>, %18, %cst_11 [0] : vector<32x1xf32> to vector<1xf32>
    %20 = vector.shape_cast %19 : vector<1xf32> to vector<1x1xf32>
    %21 = vector.broadcast %20 : vector<1x1xf32> to vector<32x1xf32>
    %22 = arith.subf %18, %21 : vector<32x1xf32>
    %23 = math.exp %22 : vector<32x1xf32>
    %24 = tpu.iota {dimensions = array<i32: 0>} : vector<4x32xi32>
    %25 = tpu.iota {dimensions = array<i32: 1>} : vector<4x32xi32>
    %c8_i32 = arith.constant 8 : i32
    %26 = vector.broadcast %c8_i32 : i32 to vector<4x32xi32>
    %27 = arith.muli %24, %26 : vector<4x32xi32>
    %28 = arith.cmpi sge, %25, %27 : vector<4x32xi32>
    %c8_i32_12 = arith.constant 8 : i32
    %29 = vector.broadcast %c8_i32_12 : i32 to vector<4x32xi32>
    %30 = arith.muli %24, %29 : vector<4x32xi32>
    %c8_i32_13 = arith.constant 8 : i32
    %31 = vector.broadcast %c8_i32_13 : i32 to vector<4x32xi32>
    %32 = arith.addi %30, %31 : vector<4x32xi32>
    %33 = arith.cmpi slt, %25, %32 : vector<4x32xi32>
    %34 = arith.andi %28, %33 : vector<4x32xi1>
    %35 = arith.extui %34 : vector<4x32xi1> to vector<4x32xi32>
    %36 = arith.sitofp %35 : vector<4x32xi32> to vector<4x32xf32>
    %37 = vector.broadcast %23 : vector<32x1xf32> to vector<32x32xf32>
    %38 = arith.mulf %7, %37 : vector<32x32xf32>
    %cst_14 = arith.constant dense<0.000000e+00> : vector<4x32xf32>
    %39 = tpu.matmul %36, %38, %cst_14 {dimension_numbers = #tpu.dot_dimension_numbers<[1], [0], [0], [1], [0, 0, 1, 1], [], []>} : vector<4x32xf32>, vector<32x32xf32>, vector<4x32xf32> -> vector<4x32xf32>
    %cst_15 = arith.constant dense<0.000000e+00> : vector<4x1xf32>
    %40 = tpu.matmul %36, %23, %cst_15 {dimension_numbers = #tpu.dot_dimension_numbers<[1], [0], [0], [1], [0, 0, 1, 1], [], []>} : vector<4x32xf32>, vector<32x1xf32>, vector<4x1xf32> -> vector<4x1xf32>
    %41 = tpu.reciprocal %40 {approx = true} : vector<4x1xf32> -> vector<4x1xf32>
    %42 = vector.broadcast %41 : vector<4x1xf32> to vector<4x32xf32>
    %43 = arith.mulf %39, %42 : vector<4x32xf32>
    %c0_16 = arith.constant 0 : index
    %c0_17 = arith.constant 0 : index
    %44 = vector.load %arg4[%c0_16, %c0_17] : memref<220x16xf32, #tpu.memory_space<vmem>>, vector<220x16xf32>
    %c0_18 = arith.constant 0 : index
    %c0_19 = arith.constant 0 : index
    %45 = vector.load %arg1[%c0_18, %c0_19] : memref<32x1xi32, #tpu.memory_space<vmem>>, vector<32x1xi32>
    %46 = tpu.iota {dimensions = array<i32: 1>} : vector<32x220xi32>
    %47 = vector.broadcast %45 : vector<32x1xi32> to vector<32x220xi32>
    %48 = arith.cmpi eq, %46, %47 : vector<32x220xi32>
    %49 = arith.extui %48 : vector<32x220xi1> to vector<32x220xi32>
    %50 = arith.sitofp %49 : vector<32x220xi32> to vector<32x220xf32>
    %cst_20 = arith.constant dense<0.000000e+00> : vector<32x16xf32>
    %51 = tpu.matmul %50, %44, %cst_20 {dimension_numbers = #tpu.dot_dimension_numbers<[1], [0], [0], [1], [0, 0, 1, 1], [], []>} : vector<32x220xf32>, vector<220x16xf32>, vector<32x16xf32> -> vector<32x16xf32>
    %c0_21 = arith.constant 0 : index
    %c0_22 = arith.constant 0 : index
    %52 = vector.load %arg9[%c0_21, %c0_22] : memref<16x8xf32, #tpu.memory_space<vmem>>, vector<16x8xf32>
    %cst_23 = arith.constant dense<0.000000e+00> : vector<32x8xf32>
    %53 = tpu.matmul %51, %52, %cst_23 {dimension_numbers = #tpu.dot_dimension_numbers<[1], [0], [0], [1], [0, 0, 1, 1], [], []>} : vector<32x16xf32>, vector<16x8xf32>, vector<32x8xf32> -> vector<32x8xf32>
    %c0_24 = arith.constant 0 : index
    %c0_25 = arith.constant 0 : index
    %54 = vector.load %arg10[%c0_24, %c0_25] : memref<1x8xf32, #tpu.memory_space<vmem>>, vector<1x8xf32>
    %55 = vector.broadcast %54 : vector<1x8xf32> to vector<32x8xf32>
    %56 = arith.addf %53, %55 : vector<32x8xf32>
    %57 = math.tanh %56 : vector<32x8xf32>
    %c0_26 = arith.constant 0 : index
    %c0_27 = arith.constant 0 : index
    %58 = vector.load %arg11[%c0_26, %c0_27] : memref<1x8xf32, #tpu.memory_space<vmem>>, vector<1x8xf32>
    %59 = vector.broadcast %58 : vector<1x8xf32> to vector<32x8xf32>
    %60 = arith.mulf %57, %59 : vector<32x8xf32>
    %cst_28 = arith.constant dense<0.000000e+00> : vector<32xf32>
    %61 = vector.multi_reduction <add>, %60, %cst_28 [1] : vector<32x8xf32> to vector<32xf32>
    %62 = vector.shape_cast %61 : vector<32xf32> to vector<32x1xf32>
    %cst_29 = arith.constant dense<0xFF800000> : vector<1xf32>
    %63 = vector.multi_reduction <maximumf>, %62, %cst_29 [0] : vector<32x1xf32> to vector<1xf32>
    %64 = vector.shape_cast %63 : vector<1xf32> to vector<1x1xf32>
    %65 = vector.broadcast %64 : vector<1x1xf32> to vector<32x1xf32>
    %66 = arith.subf %62, %65 : vector<32x1xf32>
    %67 = math.exp %66 : vector<32x1xf32>
    %68 = tpu.iota {dimensions = array<i32: 0>} : vector<4x32xi32>
    %69 = tpu.iota {dimensions = array<i32: 1>} : vector<4x32xi32>
    %c8_i32_30 = arith.constant 8 : i32
    %70 = vector.broadcast %c8_i32_30 : i32 to vector<4x32xi32>
    %71 = arith.muli %68, %70 : vector<4x32xi32>
    %72 = arith.cmpi sge, %69, %71 : vector<4x32xi32>
    %c8_i32_31 = arith.constant 8 : i32
    %73 = vector.broadcast %c8_i32_31 : i32 to vector<4x32xi32>
    %74 = arith.muli %68, %73 : vector<4x32xi32>
    %c8_i32_32 = arith.constant 8 : i32
    %75 = vector.broadcast %c8_i32_32 : i32 to vector<4x32xi32>
    %76 = arith.addi %74, %75 : vector<4x32xi32>
    %77 = arith.cmpi slt, %69, %76 : vector<4x32xi32>
    %78 = arith.andi %72, %77 : vector<4x32xi1>
    %79 = arith.extui %78 : vector<4x32xi1> to vector<4x32xi32>
    %80 = arith.sitofp %79 : vector<4x32xi32> to vector<4x32xf32>
    %81 = vector.broadcast %67 : vector<32x1xf32> to vector<32x16xf32>
    %82 = arith.mulf %51, %81 : vector<32x16xf32>
    %cst_33 = arith.constant dense<0.000000e+00> : vector<4x16xf32>
    %83 = tpu.matmul %80, %82, %cst_33 {dimension_numbers = #tpu.dot_dimension_numbers<[1], [0], [0], [1], [0, 0, 1, 1], [], []>} : vector<4x32xf32>, vector<32x16xf32>, vector<4x16xf32> -> vector<4x16xf32>
    %cst_34 = arith.constant dense<0.000000e+00> : vector<4x1xf32>
    %84 = tpu.matmul %80, %67, %cst_34 {dimension_numbers = #tpu.dot_dimension_numbers<[1], [0], [0], [1], [0, 0, 1, 1], [], []>} : vector<4x32xf32>, vector<32x1xf32>, vector<4x1xf32> -> vector<4x1xf32>
    %85 = tpu.reciprocal %84 {approx = true} : vector<4x1xf32> -> vector<4x1xf32>
    %86 = vector.broadcast %85 : vector<4x1xf32> to vector<4x16xf32>
    %87 = arith.mulf %83, %86 : vector<4x16xf32>
    %c0_35 = arith.constant 0 : index
    %c0_36 = arith.constant 0 : index
    %88 = vector.load %arg5[%c0_35, %c0_36] : memref<30x16xf32, #tpu.memory_space<vmem>>, vector<30x16xf32>
    %c0_37 = arith.constant 0 : index
    %c0_38 = arith.constant 0 : index
    %89 = vector.load %arg2[%c0_37, %c0_38] : memref<16x1xi32, #tpu.memory_space<vmem>>, vector<16x1xi32>
    %90 = tpu.iota {dimensions = array<i32: 1>} : vector<16x30xi32>
    %91 = vector.broadcast %89 : vector<16x1xi32> to vector<16x30xi32>
    %92 = arith.cmpi eq, %90, %91 : vector<16x30xi32>
    %93 = arith.extui %92 : vector<16x30xi1> to vector<16x30xi32>
    %94 = arith.sitofp %93 : vector<16x30xi32> to vector<16x30xf32>
    %cst_39 = arith.constant dense<0.000000e+00> : vector<16x16xf32>
    %95 = tpu.matmul %94, %88, %cst_39 {dimension_numbers = #tpu.dot_dimension_numbers<[1], [0], [0], [1], [0, 0, 1, 1], [], []>} : vector<16x30xf32>, vector<30x16xf32>, vector<16x16xf32> -> vector<16x16xf32>
    %c0_40 = arith.constant 0 : index
    %c0_41 = arith.constant 0 : index
    %96 = vector.load %arg12[%c0_40, %c0_41] : memref<16x8xf32, #tpu.memory_space<vmem>>, vector<16x8xf32>
    %cst_42 = arith.constant dense<0.000000e+00> : vector<16x8xf32>
    %97 = tpu.matmul %95, %96, %cst_42 {dimension_numbers = #tpu.dot_dimension_numbers<[1], [0], [0], [1], [0, 0, 1, 1], [], []>} : vector<16x16xf32>, vector<16x8xf32>, vector<16x8xf32> -> vector<16x8xf32>
    %c0_43 = arith.constant 0 : index
    %c0_44 = arith.constant 0 : index
    %98 = vector.load %arg13[%c0_43, %c0_44] : memref<1x8xf32, #tpu.memory_space<vmem>>, vector<1x8xf32>
    %99 = vector.broadcast %98 : vector<1x8xf32> to vector<16x8xf32>
    %100 = arith.addf %97, %99 : vector<16x8xf32>
    %101 = math.tanh %100 : vector<16x8xf32>
    %c0_45 = arith.constant 0 : index
    %c0_46 = arith.constant 0 : index
    %102 = vector.load %arg14[%c0_45, %c0_46] : memref<1x8xf32, #tpu.memory_space<vmem>>, vector<1x8xf32>
    %103 = vector.broadcast %102 : vector<1x8xf32> to vector<16x8xf32>
    %104 = arith.mulf %101, %103 : vector<16x8xf32>
    %cst_47 = arith.constant dense<0.000000e+00> : vector<16xf32>
    %105 = vector.multi_reduction <add>, %104, %cst_47 [1] : vector<16x8xf32> to vector<16xf32>
    %106 = vector.shape_cast %105 : vector<16xf32> to vector<16x1xf32>
    %cst_48 = arith.constant dense<0xFF800000> : vector<1xf32>
    %107 = vector.multi_reduction <maximumf>, %106, %cst_48 [0] : vector<16x1xf32> to vector<1xf32>
    %108 = vector.shape_cast %107 : vector<1xf32> to vector<1x1xf32>
    %109 = vector.broadcast %108 : vector<1x1xf32> to vector<16x1xf32>
    %110 = arith.subf %106, %109 : vector<16x1xf32>
    %111 = math.exp %110 : vector<16x1xf32>
    %112 = tpu.iota {dimensions = array<i32: 0>} : vector<4x16xi32>
    %113 = tpu.iota {dimensions = array<i32: 1>} : vector<4x16xi32>
    %c4_i32 = arith.constant 4 : i32
    %114 = vector.broadcast %c4_i32 : i32 to vector<4x16xi32>
    %115 = arith.muli %112, %114 : vector<4x16xi32>
    %116 = arith.cmpi sge, %113, %115 : vector<4x16xi32>
    %c4_i32_49 = arith.constant 4 : i32
    %117 = vector.broadcast %c4_i32_49 : i32 to vector<4x16xi32>
    %118 = arith.muli %112, %117 : vector<4x16xi32>
    %c4_i32_50 = arith.constant 4 : i32
    %119 = vector.broadcast %c4_i32_50 : i32 to vector<4x16xi32>
    %120 = arith.addi %118, %119 : vector<4x16xi32>
    %121 = arith.cmpi slt, %113, %120 : vector<4x16xi32>
    %122 = arith.andi %116, %121 : vector<4x16xi1>
    %123 = arith.extui %122 : vector<4x16xi1> to vector<4x16xi32>
    %124 = arith.sitofp %123 : vector<4x16xi32> to vector<4x16xf32>
    %125 = vector.broadcast %111 : vector<16x1xf32> to vector<16x16xf32>
    %126 = arith.mulf %95, %125 : vector<16x16xf32>
    %cst_51 = arith.constant dense<0.000000e+00> : vector<4x16xf32>
    %127 = tpu.matmul %124, %126, %cst_51 {dimension_numbers = #tpu.dot_dimension_numbers<[1], [0], [0], [1], [0, 0, 1, 1], [], []>} : vector<4x16xf32>, vector<16x16xf32>, vector<4x16xf32> -> vector<4x16xf32>
    %cst_52 = arith.constant dense<0.000000e+00> : vector<4x1xf32>
    %128 = tpu.matmul %124, %111, %cst_52 {dimension_numbers = #tpu.dot_dimension_numbers<[1], [0], [0], [1], [0, 0, 1, 1], [], []>} : vector<4x16xf32>, vector<16x1xf32>, vector<4x1xf32> -> vector<4x1xf32>
    %129 = tpu.reciprocal %128 {approx = true} : vector<4x1xf32> -> vector<4x1xf32>
    %130 = vector.broadcast %129 : vector<4x1xf32> to vector<4x16xf32>
    %131 = arith.mulf %127, %130 : vector<4x16xf32>
    %132 = vector.extract_strided_slice %43 {offsets = [0, 0], sizes = [2, 32], strides = [1, 1]} : vector<4x32xf32> to vector<2x32xf32>
    %c0_53 = arith.constant 0 : index
    %c0_54 = arith.constant 0 : index
    %133 = vector.load %arg22[%c0_53, %c0_54] : memref<2x128xf32, #tpu.memory_space<vmem>>, vector<2x32xf32>
    tpu.vector_store %arg22[%c0_53, %c0_54], %132 {strides = array<i32>} : memref<2x128xf32, #tpu.memory_space<vmem>>, vector<2x32xf32>,
    %134 = vector.extract_strided_slice %87 {offsets = [0, 0], sizes = [2, 16], strides = [1, 1]} : vector<4x16xf32> to vector<2x16xf32>
    %c0_55 = arith.constant 0 : index
    %c32 = arith.constant 32 : index
    %135 = vector.load %arg22[%c0_55, %c32] : memref<2x128xf32, #tpu.memory_space<vmem>>, vector<2x16xf32>
    tpu.vector_store %arg22[%c0_55, %c32], %134 {strides = array<i32>} : memref<2x128xf32, #tpu.memory_space<vmem>>, vector<2x16xf32>,
    %136 = vector.extract_strided_slice %131 {offsets = [0, 0], sizes = [2, 16], strides = [1, 1]} : vector<4x16xf32> to vector<2x16xf32>
    %c0_56 = arith.constant 0 : index
    %c48 = arith.constant 48 : index
    %137 = vector.load %arg22[%c0_56, %c48] : memref<2x128xf32, #tpu.memory_space<vmem>>, vector<2x16xf32>
    tpu.vector_store %arg22[%c0_56, %c48], %136 {strides = array<i32>} : memref<2x128xf32, #tpu.memory_space<vmem>>, vector<2x16xf32>,
    %138 = vector.extract_strided_slice %43 {offsets = [2, 0], sizes = [2, 32], strides = [1, 1]} : vector<4x32xf32> to vector<2x32xf32>
    %c0_57 = arith.constant 0 : index
    %c64 = arith.constant 64 : index
    %139 = vector.load %arg22[%c0_57, %c64] : memref<2x128xf32, #tpu.memory_space<vmem>>, vector<2x32xf32>
    tpu.vector_store %arg22[%c0_57, %c64], %138 {strides = array<i32>} : memref<2x128xf32, #tpu.memory_space<vmem>>, vector<2x32xf32>,
    %140 = vector.extract_strided_slice %87 {offsets = [2, 0], sizes = [2, 16], strides = [1, 1]} : vector<4x16xf32> to vector<2x16xf32>
    %c0_58 = arith.constant 0 : index
    %c96 = arith.constant 96 : index
    %141 = vector.load %arg22[%c0_58, %c96] : memref<2x128xf32, #tpu.memory_space<vmem>>, vector<2x16xf32>
    tpu.vector_store %arg22[%c0_58, %c96], %140 {strides = array<i32>} : memref<2x128xf32, #tpu.memory_space<vmem>>, vector<2x16xf32>,
    %142 = vector.extract_strided_slice %131 {offsets = [2, 0], sizes = [2, 16], strides = [1, 1]} : vector<4x16xf32> to vector<2x16xf32>
    %c0_59 = arith.constant 0 : index
    %c112 = arith.constant 112 : index
    %143 = vector.load %arg22[%c0_59, %c112] : memref<2x128xf32, #tpu.memory_space<vmem>>, vector<2x16xf32>
    tpu.vector_store %arg22[%c0_59, %c112], %142 {strides = array<i32>} : memref<2x128xf32, #tpu.memory_space<vmem>>, vector<2x16xf32>,
    %c0_60 = arith.constant 0 : index
    %c0_61 = arith.constant 0 : index
    %144 = vector.load %arg22[%c0_60, %c0_61] : memref<2x128xf32, #tpu.memory_space<vmem>>, vector<2x128xf32>
    %c0_62 = arith.constant 0 : index
    %c0_63 = arith.constant 0 : index
    %145 = vector.load %arg15[%c0_62, %c0_63] : memref<128x128xf32, #tpu.memory_space<vmem>>, vector<128x128xf32>
    %cst_64 = arith.constant dense<0.000000e+00> : vector<2x128xf32>
    %146 = tpu.matmul %144, %145, %cst_64 {dimension_numbers = #tpu.dot_dimension_numbers<[1], [0], [0], [1], [0, 0, 1, 1], [], []>} : vector<2x128xf32>, vector<128x128xf32>, vector<2x128xf32> -> vector<2x128xf32>
    %c0_65 = arith.constant 0 : index
    %c0_66 = arith.constant 0 : index
    %147 = vector.load %arg16[%c0_65, %c0_66] : memref<1x128xf32, #tpu.memory_space<vmem>>, vector<1x128xf32>
    %148 = vector.broadcast %147 : vector<1x128xf32> to vector<2x128xf32>
    %149 = arith.addf %146, %148 : vector<2x128xf32>
    %cst_67 = arith.constant 0.000000e+00 : f32
    %150 = vector.broadcast %cst_67 : f32 to vector<2x128xf32>
    %151 = arith.cmpf oge, %149, %150 : vector<2x128xf32>
    %cst_68 = arith.constant 0.00999999977 : f32
    %152 = vector.broadcast %cst_68 : f32 to vector<2x128xf32>
    %153 = arith.mulf %152, %149 : vector<2x128xf32>
    %154 = arith.select %151, %149, %153 : vector<2x128xi1>, vector<2x128xf32>
    %c0_69 = arith.constant 0 : index
    %c0_70 = arith.constant 0 : index
    %155 = vector.load %arg17[%c0_69, %c0_70] : memref<128x64xf32, #tpu.memory_space<vmem>>, vector<128x64xf32>
    %cst_71 = arith.constant dense<0.000000e+00> : vector<2x64xf32>
    %156 = tpu.matmul %154, %155, %cst_71 {dimension_numbers = #tpu.dot_dimension_numbers<[1], [0], [0], [1], [0, 0, 1, 1], [], []>} : vector<2x128xf32>, vector<128x64xf32>, vector<2x64xf32> -> vector<2x64xf32>
    %c0_72 = arith.constant 0 : index
    %c0_73 = arith.constant 0 : index
    %157 = vector.load %arg18[%c0_72, %c0_73] : memref<1x64xf32, #tpu.memory_space<vmem>>, vector<1x64xf32>
    %158 = vector.broadcast %157 : vector<1x64xf32> to vector<2x64xf32>
    %159 = arith.addf %156, %158 : vector<2x64xf32>
    %cst_74 = arith.constant 0.000000e+00 : f32
    %160 = vector.broadcast %cst_74 : f32 to vector<2x64xf32>
    %161 = arith.cmpf oge, %159, %160 : vector<2x64xf32>
    %cst_75 = arith.constant 0.00999999977 : f32
    %162 = vector.broadcast %cst_75 : f32 to vector<2x64xf32>
    %163 = arith.mulf %162, %159 : vector<2x64xf32>
    %164 = arith.select %161, %159, %163 : vector<2x64xi1>, vector<2x64xf32>
    %c0_76 = arith.constant 0 : index
    %c0_77 = arith.constant 0 : index
    %165 = vector.load %arg19[%c0_76, %c0_77] : memref<1x64xf32, #tpu.memory_space<vmem>>, vector<1x64xf32>
    %166 = vector.broadcast %165 : vector<1x64xf32> to vector<2x64xf32>
    %167 = arith.mulf %164, %166 : vector<2x64xf32>
    %cst_78 = arith.constant dense<0.000000e+00> : vector<2xf32>
    %168 = vector.multi_reduction <add>, %167, %cst_78 [1] : vector<2x64xf32> to vector<2xf32>
    %169 = vector.shape_cast %168 : vector<2xf32> to vector<2x1xf32>
    %c0_79 = arith.constant 0 : index
    %170 = memref.load %arg20[%c0_79] : memref<1xf32, #tpu.memory_space<smem>>
    %171 = vector.broadcast %170 : f32 to vector<2x1xf32>
    %172 = arith.addf %169, %171 : vector<2x1xf32>
    %cst_80 = arith.constant 0.000000e+00 : f32
    %173 = vector.broadcast %cst_80 : f32 to vector<2x1xf32>
    %174 = arith.subf %173, %172 : vector<2x1xf32>
    %175 = math.exp %174 : vector<2x1xf32>
    %cst_81 = arith.constant 1.000000e+00 : f32
    %176 = vector.broadcast %cst_81 : f32 to vector<2x1xf32>
    %177 = arith.addf %176, %175 : vector<2x1xf32>
    %178 = tpu.reciprocal %177 {approx = true} : vector<2x1xf32> -> vector<2x1xf32>
    %c0_82 = arith.constant 0 : index
    %c0_83 = arith.constant 0 : index
    %179 = vector.load %arg21[%c0_82, %c0_83] : memref<2x1xf32, #tpu.memory_space<vmem>>, vector<2x1xf32>
    tpu.vector_store %arg21[%c0_82, %c0_83], %178 {strides = array<i32>} : memref<2x1xf32, #tpu.memory_space<vmem>>, vector<2x1xf32>,
    return
  }
}

</mosaic_0001>

<llo_original>
// kernel: tpu_custom_call.1
$region0: #{tpu_custom_call.1}
  #allocation0 [shape = 'u32[]', space=smem, size = 0x4, offset = 0x4, fixed_abs, tag = 'smem constant byte address 0x4 - core index']
  #allocation1 [shape = 'u32[144,128]{1,0:T(1,128)}', space=vmem, size = 0x12000, scoped, tag = 'internal scratch']
  #allocation2 [shape = 'f32[2,128]{1,0:T(2,128)}', space=vmem, size = 0x400, scoped, tag = 'scratch operand']
  #allocation3 [shape = 'f32[1]{0:T(128)S(6)}', space=smem, size = 0x200, scoped, tag = 'scoped memory for tpu_custom_call.1']
  %s0 = inlined_call_operand.vmem [shape: s32[32,1], index: 0, kind: input, shape index: {}]
  %s1 = inlined_call_operand.vmem [shape: s32[32,1], index: 1, kind: input, shape index: {}]
  %s2 = inlined_call_operand.vmem [shape: s32[16,1], index: 2, kind: input, shape index: {}]
  %s3 = inlined_call_operand.vmem [shape: f32[200,32], index: 3, kind: input, shape index: {}]
  %s4 = inlined_call_operand.vmem [shape: f32[220,16], index: 4, kind: input, shape index: {}]
  %s5 = inlined_call_operand.vmem [shape: f32[30,16], index: 5, kind: input, shape index: {}]
  %s6 = inlined_call_operand.vmem [shape: f32[32,16], index: 6, kind: input, shape index: {}]
  %s7 = inlined_call_operand.vmem [shape: f32[1,16], index: 7, kind: input, shape index: {}]
  %s8 = inlined_call_operand.vmem [shape: f32[1,16], index: 8, kind: input, shape index: {}]
  %s9 = inlined_call_operand.vmem [shape: f32[16,8], index: 9, kind: input, shape index: {}]
  %s10 = inlined_call_operand.vmem [shape: f32[1,8], index: 10, kind: input, shape index: {}]
  %s11 = inlined_call_operand.vmem [shape: f32[1,8], index: 11, kind: input, shape index: {}]
  %s12 = inlined_call_operand.vmem [shape: f32[16,8], index: 12, kind: input, shape index: {}]
  %s13 = inlined_call_operand.vmem [shape: f32[1,8], index: 13, kind: input, shape index: {}]
  %s14 = inlined_call_operand.vmem [shape: f32[1,8], index: 14, kind: input, shape index: {}]
  %s15 = inlined_call_operand.vmem [shape: f32[128,128], index: 15, kind: input, shape index: {}]
  %s16 = inlined_call_operand.vmem [shape: f32[1,128], index: 16, kind: input, shape index: {}]
  %s17 = inlined_call_operand.vmem [shape: f32[128,64], index: 17, kind: input, shape index: {}]
  %s18 = inlined_call_operand.vmem [shape: f32[1,64], index: 18, kind: input, shape index: {}]
  %s19 = inlined_call_operand.vmem [shape: f32[1,64], index: 19, kind: input, shape index: {}]
  %s20 = inlined_call_operand.<no memory space> [shape: f32[1], index: 20, kind: input, shape index: {}]
  %s21 = inlined_call_operand.vmem [shape: f32[2,1], index: 21, kind: output, shape index: {}]
  %s22 = sld [smem:[#allocation0]]
  $region94: #{tpu_custom_call.1} parent=0
    _
  %s24 = ssub.s32 1, %s22
  %s25 = scalar_select 0, %s24, %s22
  %26 = sst [smem:[#allocation3]] %s20
  // Predicated region
  $region2: #{tpu_custom_call.1} parent=0 // pred_check
    _
  $region3: #{tpu_custom_call.1} parent=0 // pred_check_branch
    %28 = sbr.rel (0) target = $region5
  $region4: #{tpu_custom_call.1} parent=0 // pred_region
    _
  $region5: #{tpu_custom_call.1} parent=0 // pred_fallthru
    _
  // Predicated region
  $region6: #{tpu_custom_call.1} parent=0 // pred_check
    _
  $region7: #{tpu_custom_call.1} parent=0 // pred_check_branch
    %30 = sbr.rel (0) target = $region9
  $region8: #{tpu_custom_call.1} parent=0 // pred_region
    _
  $region9: #{tpu_custom_call.1} parent=0 // pred_fallthru
    _
  // Predicated region
  $region10: #{tpu_custom_call.1} parent=0 // pred_check
    _
  $region11: #{tpu_custom_call.1} parent=0 // pred_check_branch
    %32 = sbr.rel (0) target = $region13
  $region12: #{tpu_custom_call.1} parent=0 // pred_region
    _
  $region13: #{tpu_custom_call.1} parent=0 // pred_fallthru
    _
  // Predicated region
  $region14: #{tpu_custom_call.1} parent=0 // pred_check
    _
  $region15: #{tpu_custom_call.1} parent=0 // pred_check_branch
    %34 = sbr.rel (0) target = $region17
  $region16: #{tpu_custom_call.1} parent=0 // pred_region
    _
  $region17: #{tpu_custom_call.1} parent=0 // pred_fallthru
    _
  // Predicated region
  $region18: #{tpu_custom_call.1} parent=0 // pred_check
    _
  $region19: #{tpu_custom_call.1} parent=0 // pred_check_branch
    %36 = sbr.rel (0) target = $region21
  $region20: #{tpu_custom_call.1} parent=0 // pred_region
    _
  $region21: #{tpu_custom_call.1} parent=0 // pred_fallthru
    _
  // Predicated region
  $region22: #{tpu_custom_call.1} parent=0 // pred_check
    _
  $region23: #{tpu_custom_call.1} parent=0 // pred_check_branch
    %38 = sbr.rel (0) target = $region25
  $region24: #{tpu_custom_call.1} parent=0 // pred_region
    _
  $region25: #{tpu_custom_call.1} parent=0 // pred_fallthru
    _
  // Predicated region
  $region26: #{tpu_custom_call.1} parent=0 // pred_check
    _
  $region27: #{tpu_custom_call.1} parent=0 // pred_check_branch
    %40 = sbr.rel (0) target = $region29
  $region28: #{tpu_custom_call.1} parent=0 // pred_region
    _
  $region29: #{tpu_custom_call.1} parent=0 // pred_fallthru
    _
  // Predicated region
  $region30: #{tpu_custom_call.1} parent=0 // pred_check
    _
  $region31: #{tpu_custom_call.1} parent=0 // pred_check_branch
    %42 = sbr.rel (0) target = $region33
  $region32: #{tpu_custom_call.1} parent=0 // pred_region
    _
  $region33: #{tpu_custom_call.1} parent=0 // pred_fallthru
    _
  // Predicated region
  $region34: #{tpu_custom_call.1} parent=0 // pred_check
    _
  $region35: #{tpu_custom_call.1} parent=0 // pred_check_branch
    %44 = sbr.rel (0) target = $region37
  $region36: #{tpu_custom_call.1} parent=0 // pred_region
    _
  $region37: #{tpu_custom_call.1} parent=0 // pred_fallthru
    _
  // Predicated region
  $region38: #{tpu_custom_call.1} parent=0 // pred_check
    _
  $region39: #{tpu_custom_call.1} parent=0 // pred_check_branch
    %46 = sbr.rel (0) target = $region41
  $region40: #{tpu_custom_call.1} parent=0 // pred_region
    _
  $region41: #{tpu_custom_call.1} parent=0 // pred_fallthru
    _
  // Predicated region
  $region42: #{tpu_custom_call.1} parent=0 // pred_check
    _
  $region43: #{tpu_custom_call.1} parent=0 // pred_check_branch
    %48 = sbr.rel (0) target = $region45
  $region44: #{tpu_custom_call.1} parent=0 // pred_region
    _
  $region45: #{tpu_custom_call.1} parent=0 // pred_fallthru
    _
  // Predicated region
  $region46: #{tpu_custom_call.1} parent=0 // pred_check
    _
  $region47: #{tpu_custom_call.1} parent=0 // pred_check_branch
    %50 = sbr.rel (0) target = $region49
  $region48: #{tpu_custom_call.1} parent=0 // pred_region
    _
  $region49: #{tpu_custom_call.1} parent=0 // pred_fallthru
    _
  // Predicated region
  $region50: #{tpu_custom_call.1} parent=0 // pred_check
    _
  $region51: #{tpu_custom_call.1} parent=0 // pred_check_branch
    %52 = sbr.rel (0) target = $region53
  $region52: #{tpu_custom_call.1} parent=0 // pred_region
    _
  $region53: #{tpu_custom_call.1} parent=0 // pred_fallthru
    _
  // Predicated region
  $region54: #{tpu_custom_call.1} parent=0 // pred_check
    _
  $region55: #{tpu_custom_call.1} parent=0 // pred_check_branch
    %54 = sbr.rel (0) target = $region57
  $region56: #{tpu_custom_call.1} parent=0 // pred_region
    _
  $region57: #{tpu_custom_call.1} parent=0 // pred_fallthru
    _
  // Predicated region
  $region58: #{tpu_custom_call.1} parent=0 // pred_check
    _
  $region59: #{tpu_custom_call.1} parent=0 // pred_check_branch
    %56 = sbr.rel (0) target = $region61
  $region60: #{tpu_custom_call.1} parent=0 // pred_region
    _
  $region61: #{tpu_custom_call.1} parent=0 // pred_fallthru
    _
  // Predicated region
  $region62: #{tpu_custom_call.1} parent=0 // pred_check
    _
  $region63: #{tpu_custom_call.1} parent=0 // pred_check_branch
    %58 = sbr.rel (0) target = $region65
  $region64: #{tpu_custom_call.1} parent=0 // pred_region
    _
  $region65: #{tpu_custom_call.1} parent=0 // pred_fallthru
    _
  // Predicated region
  $region66: #{tpu_custom_call.1} parent=0 // pred_check
    _
  $region67: #{tpu_custom_call.1} parent=0 // pred_check_branch
    %60 = sbr.rel (0) target = $region69
  $region68: #{tpu_custom_call.1} parent=0 // pred_region
    _
  $region69: #{tpu_custom_call.1} parent=0 // pred_fallthru
    _
  // Predicated region
  $region70: #{tpu_custom_call.1} parent=0 // pred_check
    _
  $region71: #{tpu_custom_call.1} parent=0 // pred_check_branch
    %62 = sbr.rel (0) target = $region73
  $region72: #{tpu_custom_call.1} parent=0 // pred_region
    _
  $region73: #{tpu_custom_call.1} parent=0 // pred_fallthru
    _
  // Predicated region
  $region74: #{tpu_custom_call.1} parent=0 // pred_check
    _
  $region75: #{tpu_custom_call.1} parent=0 // pred_check_branch
    %64 = sbr.rel (0) target = $region77
  $region76: #{tpu_custom_call.1} parent=0 // pred_region
    _
  $region77: #{tpu_custom_call.1} parent=0 // pred_fallthru
    _
  // Predicated region
  $region78: #{tpu_custom_call.1} parent=0 // pred_check
    _
  $region79: #{tpu_custom_call.1} parent=0 // pred_check_branch
    %66 = sbr.rel (0) target = $region81
  $region80: #{tpu_custom_call.1} parent=0 // pred_region
    _
  $region81: #{tpu_custom_call.1} parent=0 // pred_fallthru
    _
  // Predicated region
  $region82: #{tpu_custom_call.1} parent=0 // pred_check
    _
  $region83: #{tpu_custom_call.1} parent=0 // pred_check_branch
    %68 = sbr.rel (0) target = $region85
  $region84: #{tpu_custom_call.1} parent=0 // pred_region
    _
  $region85: #{tpu_custom_call.1} parent=0 // pred_fallthru
    _
  %v69 = vld [vmem:[%s3] sm:$0xff]
  %v70 = vld [vmem:[%s3 + $0x8] sm:$0xff]
  %v71 = vld [vmem:[%s3 + $0x10] sm:$0xff]
  %v72 = vld [vmem:[%s3 + $0x18] sm:$0xff]
  %v73 = vld [vmem:[%s3 + $0x20] sm:$0xff]
  %v74 = vld [vmem:[%s3 + $0x28] sm:$0xff]
  %v75 = vld [vmem:[%s3 + $0x30] sm:$0xff]
  %v76 = vld [vmem:[%s3 + $0x38] sm:$0xff]
  %v77 = vld [vmem:[%s3 + $0x40] sm:$0xff]
  %v78 = vld [vmem:[%s3 + $0x48] sm:$0xff]
  %v79 = vld [vmem:[%s3 + $0x50] sm:$0xff]
  %v80 = vld [vmem:[%s3 + $0x58] sm:$0xff]
  %v81 = vld [vmem:[%s3 + $0x60] sm:$0xff]
  %v82 = vld [vmem:[%s3 + $0x68] sm:$0xff]
  %v83 = vld [vmem:[%s3 + $0x70] sm:$0xff]
  %v84 = vld [vmem:[%s3 + $0x78] sm:$0xff]
  %v85 = vld [vmem:[%s3 + $0x80] sm:$0xff]
  %v86 = vld [vmem:[%s3 + $0x88] sm:$0xff]
  %v87 = vld [vmem:[%s3 + $0x90] sm:$0xff]
  %v88 = vld [vmem:[%s3 + $0x98] sm:$0xff]
  %v89 = vld [vmem:[%s3 + $0xa0] sm:$0xff]
  %v90 = vld [vmem:[%s3 + $0xa8] sm:$0xff]
  %v91 = vld [vmem:[%s3 + $0xb0] sm:$0xff]
  %v92 = vld [vmem:[%s3 + $0xb8] sm:$0xff]
  %v93 = vld [vmem:[%s3 + $0xc0] sm:$0xff]
  %v94 = vld [vmem:[%s0] sm:$0xff]
  %v95 = vld [vmem:[%s0 + $0x8] sm:$0xff]
  %v96 = vld [vmem:[%s0 + $0x10] sm:$0xff]
  %v97 = vld [vmem:[%s0 + $0x18] sm:$0xff]
  %v98 = vlaneseq
  %v99 = vand.u32 %v98, 127
  %v100 = vadd.s32 %v99, 128
  %101 = vset.pattern.permute.xlu0 0
  %102 = vperm.xlu0 %101, %v94
  %v103 = vpop.permute.xlu0 %102
  %104 = vset.pattern.permute.xlu0 0
  %105 = vperm.xlu0 %104, %v95
  %v106 = vpop.permute.xlu0 %105
  %107 = vset.pattern.permute.xlu0 0
  %108 = vperm.xlu0 %107, %v96
  %v109 = vpop.permute.xlu0 %108
  %110 = vset.pattern.permute.xlu0 0
  %111 = vperm.xlu0 %110, %v97
  %v112 = vpop.permute.xlu0 %111
  %vm113 = vcmp.eq.s32.totalorder %v99, %v103
  %vm114 = vcmp.eq.s32.totalorder %v100, %v103
  %vm115 = vcmp.eq.s32.totalorder %v99, %v106
  %vm116 = vcmp.eq.s32.totalorder %v100, %v106
  %vm117 = vcmp.eq.s32.totalorder %v99, %v109
  %vm118 = vcmp.eq.s32.totalorder %v100, %v109
  %vm119 = vcmp.eq.s32.totalorder %v99, %v112
  %vm120 = vcmp.eq.s32.totalorder %v100, %v112
  %v121 = vsel %vm113, 1, 0
  %v122 = vsel %vm114, 1, 0
  %v123 = vsel %vm115, 1, 0
  %v124 = vsel %vm116, 1, 0
  %v125 = vsel %vm117, 1, 0
  %v126 = vsel %vm118, 1, 0
  %v127 = vsel %vm119, 1, 0
  %v128 = vsel %vm120, 1, 0
  %v129 = vcvt.s32.f32 %v121
  %v130 = vcvt.s32.f32 %v122
  %v131 = vcvt.s32.f32 %v123
  %v132 = vcvt.s32.f32 %v124
  %v133 = vcvt.s32.f32 %v125
  %v134 = vcvt.s32.f32 %v126
  %v135 = vcvt.s32.f32 %v127
  %v136 = vcvt.s32.f32 %v128
  %vm137 = vcmask 588800
  %v139 = vsel %vm137, %v130, 0
  %v142 = vsel %vm137, %v132, 0
  %v145 = vsel %vm137, %v134, 0
  %v148 = vsel %vm137, %v136, 0
  %150 = vmatprep.subr.mxu0 0.0
  %151 = vmatpush1.msra.mxu0 %v69
  %152 = vmatprep.subr.mxu0 0.0
  %153 = vmatpush1.msra.mxu0 %v70
  %154 = vmatprep.subr.mxu0 0.0
  %155 = vmatpush1.msra.mxu0 %v71
  %156 = vmatprep.subr.mxu0 0.0
  %157 = vmatpush1.msra.mxu0 %v72
  %158 = vmatprep.subr.mxu0 0.0
  %159 = vmatpush1.msra.mxu0 %v73
  %160 = vmatprep.subr.mxu0 0.0
  %161 = vmatpush1.msra.mxu0 %v74
  %162 = vmatprep.subr.mxu0 0.0
  %163 = vmatpush1.msra.mxu0 %v75
  %164 = vmatprep.subr.mxu0 0.0
  %165 = vmatpush1.msra.mxu0 %v76
  %166 = vmatprep.subr.mxu0 0.0
  %167 = vmatpush1.msra.mxu0 %v77
  %168 = vmatprep.subr.mxu0 0.0
  %169 = vmatpush1.msra.mxu0 %v78
  %170 = vmatprep.subr.mxu0 0.0
  %171 = vmatpush1.msra.mxu0 %v79
  %172 = vmatprep.subr.mxu0 0.0
  %173 = vmatpush1.msra.mxu0 %v80
  %174 = vmatprep.subr.mxu0 0.0
  %175 = vmatpush1.msra.mxu0 %v81
  %176 = vmatprep.subr.mxu0 0.0
  %177 = vmatpush1.msra.mxu0 %v82
  %178 = vmatprep.subr.mxu0 0.0
  %179 = vmatpush1.msra.mxu0 %v83
  %180 = vmatprep.subr.mxu0 0.0
  %181 = vmatpush1.msra.mxu0 %v84
  %182 = vmatprep.subr.mxu0 0.0
  %183 = vmatpush1.msra.mxu0 %v85
  %184 = vmatprep.subr.mxu0 0.0
  %185 = vmatpush1.msra.mxu0 %v86
  %186 = vmatprep.subr.mxu0 0.0
  %187 = vmatpush1.msra.mxu0 %v87
  %188 = vmatprep.subr.mxu0 0.0
  %189 = vmatpush1.msra.mxu0 %v88
  %190 = vmatprep.subr.mxu0 0.0
  %191 = vmatpush1.msra.mxu0 %v89
  %192 = vmatprep.subr.mxu0 0.0
  %193 = vmatpush1.msra.mxu0 %v90
  %194 = vmatprep.subr.mxu0 0.0
  %195 = vmatpush1.msra.mxu0 %v91
  %196 = vmatprep.subr.mxu0 0.0
  %197 = vmatpush1.msra.mxu0 %v92
  %198 = vmatprep.subr.mxu0 0.0
  %199 = vmatpush1.msra.mxu0 %v93
  %200 = vmatprep.subr.mxu0 0.0
  %201 = vmatpush1.msra.mxu0 0.0
  %202 = vmatprep.subr.mxu0 0.0
  %203 = vmatpush1.msra.mxu0 0.0
  %204 = vmatprep.subr.mxu0 0.0
  %205 = vmatpush1.msra.mxu0 0.0
  %206 = vmatprep.subr.mxu0 0.0
  %207 = vmatpush1.msra.mxu0 0.0
  %208 = vmatprep.subr.mxu0 0.0
  %209 = vmatpush1.msra.mxu0 0.0
  %210 = vmatprep.subr.mxu0 0.0
  %211 = vmatpush1.msra.mxu0 0.0
  %212 = vmatprep.subr.mxu0 0.0
  %213 = vmatpush1.msra.mxu0 0.0
  %214 = vmatprep.mubr.f32.mxu0 %v139
  %215 = vmatmul.mubr.f32.gmra.mrb[0].mxu0 %v129
  %v216 = vpop.f32.mrb[0].mxu0
  %v217 = vadd.f32 0.0, %v216
  %v218 = vpop.f32.mrb[0].mxu0
  %219 = vmatprep.mubr.f32.mxu0 %v142
  %220 = vmatmul.mubr.f32.gmra.mrb[0].mxu0 %v131
  %v221 = vpop.f32.mrb[0].mxu0
  %v222 = vadd.f32 0.0, %v221
  %v223 = vpop.f32.mrb[0].mxu0
  %224 = vmatprep.mubr.f32.mxu0 %v145
  %225 = vmatmul.mubr.f32.gmra.mrb[0].mxu0 %v133
  %v226 = vpop.f32.mrb[0].mxu0
  %v227 = vadd.f32 0.0, %v226
  %v228 = vpop.f32.mrb[0].mxu0
  %229 = vmatprep.mubr.f32.mxu0 %v148
  %230 = vmatmul.mubr.f32.gmra.mrb[0].mxu0 %v135
  %v231 = vpop.f32.mrb[0].mxu0
  %v232 = vadd.f32 0.0, %v231
  %v233 = vpop.f32.mrb[0].mxu0
  %234 = vdwg.mxu0
  %v235 = vld [vmem:[%s6] sm:$0xff]
  %v236 = vld [vmem:[%s6 + $0x8] sm:$0xff]
  %v237 = vld [vmem:[%s6 + $0x10] sm:$0xff]
  %v238 = vld [vmem:[%s6 + $0x18] sm:$0xff]
  %v239 = vld [vmem:[%s7] sm:$0x1]
  %v241 = vlaneseq
  %v242 = vshrl.u32 %v241, 7
  %v243 = vsub.s32 0, %v242
  %v244 = vrot.slane %v239, %v243
  %vm246 = vcmask 261120
  %v248 = vsel %vm246, %v217, 0
  %v251 = vsel %vm246, %v222, 0
  %v254 = vsel %vm246, %v227, 0
  %v257 = vsel %vm246, %v232, 0
  %259 = vmatprep.subr.mxu0 0.0
  %260 = vmatpush1.msra.mxu0 %v235
  %261 = vmatprep.subr.mxu0 0.0
  %262 = vmatpush1.msra.mxu0 %v236
  %263 = vmatprep.subr.mxu0 0.0
  %264 = vmatpush1.msra.mxu0 %v237
  %265 = vmatprep.subr.mxu0 0.0
  %266 = vmatpush1.msra.mxu0 %v238
  %267 = vmatprep.subr.mxu0 0.0
  %268 = vmatpush1.msra.mxu0 0.0
  %269 = vmatprep.subr.mxu0 0.0
  %270 = vmatpush1.msra.mxu0 0.0
  %271 = vmatprep.subr.mxu0 0.0
  %272 = vmatpush1.msra.mxu0 0.0
  %273 = vmatprep.subr.mxu0 0.0
  %274 = vmatpush1.msra.mxu0 0.0
  %275 = vmatprep.subr.mxu0 0.0
  %276 = vmatpush1.msra.mxu0 0.0
  %277 = vmatprep.subr.mxu0 0.0
  %278 = vmatpush1.msra.mxu0 0.0
  %279 = vmatprep.subr.mxu0 0.0
  %280 = vmatpush1.msra.mxu0 0.0
  %281 = vmatprep.subr.mxu0 0.0
  %282 = vmatpush1.msra.mxu0 0.0
  %283 = vmatprep.subr.mxu0 0.0
  %284 = vmatpush1.msra.mxu0 0.0
  %285 = vmatprep.subr.mxu0 0.0
  %286 = vmatpush1.msra.mxu0 0.0
  %287 = vmatprep.subr.mxu0 0.0
  %288 = vmatpush1.msra.mxu0 0.0
  %289 = vmatprep.subr.mxu0 0.0
  %290 = vmatpush1.msra.mxu0 0.0
  %291 = vmatprep.subr.mxu0 0.0
  %292 = vmatpush1.msra.mxu0 0.0
  %293 = vmatprep.subr.mxu0 0.0
  %294 = vmatpush1.msra.mxu0 0.0
  %295 = vmatprep.subr.mxu0 0.0
  %296 = vmatpush1.msra.mxu0 0.0
  %297 = vmatprep.subr.mxu0 0.0
  %298 = vmatpush1.msra.mxu0 0.0
  %299 = vmatprep.subr.mxu0 0.0
  %300 = vmatpush1.msra.mxu0 0.0
  %301 = vmatprep.subr.mxu0 0.0
  %302 = vmatpush1.msra.mxu0 0.0
  %303 = vmatprep.subr.mxu0 0.0
  %304 = vmatpush1.msra.mxu0 0.0
  %305 = vmatprep.subr.mxu0 0.0
  %306 = vmatpush1.msra.mxu0 0.0
  %307 = vmatprep.subr.mxu0 0.0
  %308 = vmatpush1.msra.mxu0 0.0
  %309 = vmatprep.subr.mxu0 0.0
  %310 = vmatpush1.msra.mxu0 0.0
  %311 = vmatprep.subr.mxu0 0.0
  %312 = vmatpush1.msra.mxu0 0.0
  %313 = vmatprep.subr.mxu0 0.0
  %314 = vmatpush1.msra.mxu0 0.0
  %315 = vmatprep.subr.mxu0 0.0
  %316 = vmatpush1.msra.mxu0 0.0
  %317 = vmatprep.subr.mxu0 0.0
  %318 = vmatpush1.msra.mxu0 0.0
  %319 = vmatprep.subr.mxu0 0.0
  %320 = vmatpush1.msra.mxu0 0.0
  %321 = vmatprep.subr.mxu0 0.0
  %322 = vmatpush1.msra.mxu0 0.0
  %323 = vmatprep.mubr.f32.mxu0 0.0
  %324 = vmatmul.mubr.f32.gmra.mrb[0].mxu0 %v248
  %v325 = vpop.f32.mrb[0].mxu0
  %v326 = vadd.f32 %v244, %v325
  %v327 = vpop.f32.mrb[0].mxu0
  %328 = vmatprep.mubr.f32.mxu0 0.0
  %329 = vmatmul.mubr.f32.gmra.mrb[0].mxu0 %v251
  %v330 = vpop.f32.mrb[0].mxu0
  %v331 = vadd.f32 %v244, %v330
  %v332 = vpop.f32.mrb[0].mxu0
  %333 = vmatprep.mubr.f32.mxu0 0.0
  %334 = vmatmul.mubr.f32.gmra.mrb[0].mxu0 %v254
  %v335 = vpop.f32.mrb[0].mxu0
  %v336 = vadd.f32 %v244, %v335
  %v337 = vpop.f32.mrb[0].mxu0
  %338 = vmatprep.mubr.f32.mxu0 0.0
  %339 = vmatmul.mubr.f32.gmra.mrb[0].mxu0 %v257
  %v340 = vpop.f32.mrb[0].mxu0
  %v341 = vadd.f32 %v244, %v340
  %v342 = vpop.f32.mrb[0].mxu0
  %343 = vdwg.mxu0
  %v344 = vtanh.pop %v326
  %v345 = vtanh.pop %v331
  %v346 = vtanh.pop %v336
  %v347 = vtanh.pop %v341
  %v348 = vld [vmem:[%s8] sm:$0x1]
  %v350 = vlaneseq
  %v351 = vshrl.u32 %v350, 7
  %v352 = vsub.s32 0, %v351
  %v353 = vrot.slane %v348, %v352
  %v355 = vmul.f32 %v344, %v353
  %v356 = vmul.f32 %v345, %v353
  %v357 = vmul.f32 %v346, %v353
  %v358 = vmul.f32 %v347, %v353
  %vm359 = vcmask 130048
  %v360 = vsel %vm359, %v355, 0.0
  %361 = vadd.xlane.f32.xlu0 %v360
  %v362 = vpop.xlane.xlu0 %361
  %v363 = vsel %vm359, %v356, 0.0
  %364 = vadd.xlane.f32.xlu0 %v363
  %v365 = vpop.xlane.xlu0 %364
  %v366 = vsel %vm359, %v357, 0.0
  %367 = vadd.xlane.f32.xlu0 %v366
  %v368 = vpop.xlane.xlu0 %367
  %v369 = vsel %vm359, %v358, 0.0
  %370 = vadd.xlane.f32.xlu0 %v369
  %v371 = vpop.xlane.xlu0 %370
  %v372 = vmax.f32 %v362, %v365
  %v373 = vmax.f32 %v368, %v371
  %v374 = vmax.f32 %v372, %v373
  %v375 = vrot.slane %v374, 4
  %v376 = vmax.f32 %v374, %v375
  %v377 = vrot.slane %v376, 2
  %v378 = vmax.f32 %v376, %v377
  %v379 = vrot.slane %v378, 1
  %v380 = vmax.f32 %v378, %v379
  %v381 = vsub.f32 %v362, %v380
  %v382 = vsub.f32 %v365, %v380
  %v383 = vsub.f32 %v368, %v380
  %v384 = vsub.f32 %v371, %v380
  %v385 = vmul.f32 %v381, 1.442695
  %v386 = vpow.pop %v385
  %v387 = vmul.f32 %v382, 1.442695
  %v388 = vpow.pop %v387
  %v389 = vmul.f32 %v383, 1.442695
  %v390 = vpow.pop %v389
  %v391 = vmul.f32 %v384, 1.442695
  %v392 = vpow.pop %v391
  %v393 = vlaneseq
  %v394 = vshrl.u32 %v393, 7
  %v395 = vmul.u32 %v394, 8
  %vm396 = vcmp.ge.s32.totalorder %v99, %v395
  %v397 = vadd.s32 %v395, 8
  %vm398 = vcmp.lt.s32.totalorder %v99, %v397
  %vm399 = vmand %vm396, %vm398
  %v400 = vsel %vm399, 1, 0
  %v401 = vcvt.s32.f32 %v400
  %v402 = vmul.f32 %v217, %v386
  %v403 = vmul.f32 %v222, %v388
  %v404 = vmul.f32 %v227, %v390
  %v405 = vmul.f32 %v232, %v392
  %v407 = vsel %vm246, %v401, 0
  %409 = vmatprep.subr.mxu0 0.0
  %410 = vmatpush1.msra.mxu0 %v402
  %411 = vmatprep.subr.mxu0 0.0
  %412 = vmatpush1.msra.mxu0 %v403
  %413 = vmatprep.subr.mxu0 0.0
  %414 = vmatpush1.msra.mxu0 %v404
  %415 = vmatprep.subr.mxu0 0.0
  %416 = vmatpush1.msra.mxu0 %v405
  %417 = vmatprep.subr.mxu0 0.0
  %418 = vmatpush1.msra.mxu0 0.0
  %419 = vmatprep.subr.mxu0 0.0
  %420 = vmatpush1.msra.mxu0 0.0
  %421 = vmatprep.subr.mxu0 0.0
  %422 = vmatpush1.msra.mxu0 0.0
  %423 = vmatprep.subr.mxu0 0.0
  %424 = vmatpush1.msra.mxu0 0.0
  %425 = vmatprep.subr.mxu0 0.0
  %426 = vmatpush1.msra.mxu0 0.0
  %427 = vmatprep.subr.mxu0 0.0
  %428 = vmatpush1.msra.mxu0 0.0
  %429 = vmatprep.subr.mxu0 0.0
  %430 = vmatpush1.msra.mxu0 0.0
  %431 = vmatprep.subr.mxu0 0.0
  %432 = vmatpush1.msra.mxu0 0.0
  %433 = vmatprep.subr.mxu0 0.0
  %434 = vmatpush1.msra.mxu0 0.0
  %435 = vmatprep.subr.mxu0 0.0
  %436 = vmatpush1.msra.mxu0 0.0
  %437 = vmatprep.subr.mxu0 0.0
  %438 = vmatpush1.msra.mxu0 0.0
  %439 = vmatprep.subr.mxu0 0.0
  %440 = vmatpush1.msra.mxu0 0.0
  %441 = vmatprep.subr.mxu0 0.0
  %442 = vmatpush1.msra.mxu0 0.0
  %443 = vmatprep.subr.mxu0 0.0
  %444 = vmatpush1.msra.mxu0 0.0
  %445 = vmatprep.subr.mxu0 0.0
  %446 = vmatpush1.msra.mxu0 0.0
  %447 = vmatprep.subr.mxu0 0.0
  %448 = vmatpush1.msra.mxu0 0.0
  %449 = vmatprep.subr.mxu0 0.0
  %450 = vmatpush1.msra.mxu0 0.0
  %451 = vmatprep.subr.mxu0 0.0
  %452 = vmatpush1.msra.mxu0 0.0
  %453 = vmatprep.subr.mxu0 0.0
  %454 = vmatpush1.msra.mxu0 0.0
  %455 = vmatprep.subr.mxu0 0.0
  %456 = vmatpush1.msra.mxu0 0.0
  %457 = vmatprep.subr.mxu0 0.0
  %458 = vmatpush1.msra.mxu0 0.0
  %459 = vmatprep.subr.mxu0 0.0
  %460 = vmatpush1.msra.mxu0 0.0
  %461 = vmatprep.subr.mxu0 0.0
  %462 = vmatpush1.msra.mxu0 0.0
  %463 = vmatprep.subr.mxu0 0.0
  %464 = vmatpush1.msra.mxu0 0.0
  %465 = vmatprep.subr.mxu0 0.0
  %466 = vmatpush1.msra.mxu0 0.0
  %467 = vmatprep.subr.mxu0 0.0
  %468 = vmatpush1.msra.mxu0 0.0
  %469 = vmatprep.subr.mxu0 0.0
  %470 = vmatpush1.msra.mxu0 0.0
  %471 = vmatprep.subr.mxu0 0.0
  %472 = vmatpush1.msra.mxu0 0.0
  %473 = vmatprep.mubr.f32.mxu0 0.0
  %474 = vmatmul.mubr.f32.gmra.mrb[0].mxu0 %v407
  %v475 = vpop.f32.mrb[0].mxu0
  %v476 = vadd.f32 0.0, %v475
  %v477 = vpop.f32.mrb[0].mxu0
  %478 = vdwg.mxu0
  %479 = vmatprep.subr.mxu0 0.0
  %480 = vmatpush1.msra.mxu0 %v386
  %481 = vmatprep.subr.mxu0 0.0
  %482 = vmatpush1.msra.mxu0 %v388
  %483 = vmatprep.subr.mxu0 0.0
  %484 = vmatpush1.msra.mxu0 %v390
  %485 = vmatprep.subr.mxu0 0.0
  %486 = vmatpush1.msra.mxu0 %v392
  %487 = vmatprep.subr.mxu0 0.0
  %488 = vmatpush1.msra.mxu0 0.0
  %489 = vmatprep.subr.mxu0 0.0
  %490 = vmatpush1.msra.mxu0 0.0
  %491 = vmatprep.subr.mxu0 0.0
  %492 = vmatpush1.msra.mxu0 0.0
  %493 = vmatprep.subr.mxu0 0.0
  %494 = vmatpush1.msra.mxu0 0.0
  %495 = vmatprep.subr.mxu0 0.0
  %496 = vmatpush1.msra.mxu0 0.0
  %497 = vmatprep.subr.mxu0 0.0
  %498 = vmatpush1.msra.mxu0 0.0
  %499 = vmatprep.subr.mxu0 0.0
  %500 = vmatpush1.msra.mxu0 0.0
  %501 = vmatprep.subr.mxu0 0.0
  %502 = vmatpush1.msra.mxu0 0.0
  %503 = vmatprep.subr.mxu0 0.0
  %504 = vmatpush1.msra.mxu0 0.0
  %505 = vmatprep.subr.mxu0 0.0
  %506 = vmatpush1.msra.mxu0 0.0
  %507 = vmatprep.subr.mxu0 0.0
  %508 = vmatpush1.msra.mxu0 0.0
  %509 = vmatprep.subr.mxu0 0.0
  %510 = vmatpush1.msra.mxu0 0.0
  %511 = vmatprep.subr.mxu0 0.0
  %512 = vmatpush1.msra.mxu0 0.0
  %513 = vmatprep.subr.mxu0 0.0
  %514 = vmatpush1.msra.mxu0 0.0
  %515 = vmatprep.subr.mxu0 0.0
  %516 = vmatpush1.msra.mxu0 0.0
  %517 = vmatprep.subr.mxu0 0.0
  %518 = vmatpush1.msra.mxu0 0.0
  %519 = vmatprep.subr.mxu0 0.0
  %520 = vmatpush1.msra.mxu0 0.0
  %521 = vmatprep.subr.mxu0 0.0
  %522 = vmatpush1.msra.mxu0 0.0
  %523 = vmatprep.subr.mxu0 0.0
  %524 = vmatpush1.msra.mxu0 0.0
  %525 = vmatprep.subr.mxu0 0.0
  %526 = vmatpush1.msra.mxu0 0.0
  %527 = vmatprep.subr.mxu0 0.0
  %528 = vmatpush1.msra.mxu0 0.0
  %529 = vmatprep.subr.mxu0 0.0
  %530 = vmatpush1.msra.mxu0 0.0
  %531 = vmatprep.subr.mxu0 0.0
  %532 = vmatpush1.msra.mxu0 0.0
  %533 = vmatprep.subr.mxu0 0.0
  %534 = vmatpush1.msra.mxu0 0.0
  %535 = vmatprep.subr.mxu0 0.0
  %536 = vmatpush1.msra.mxu0 0.0
  %537 = vmatprep.subr.mxu0 0.0
  %538 = vmatpush1.msra.mxu0 0.0
  %539 = vmatprep.subr.mxu0 0.0
  %540 = vmatpush1.msra.mxu0 0.0
  %541 = vmatprep.subr.mxu0 0.0
  %542 = vmatpush1.msra.mxu0 0.0
  %543 = vmatprep.mubr.f32.mxu0 0.0
  %544 = vmatmul.mubr.f32.gmra.mrb[0].mxu0 %v407
  %v545 = vpop.f32.mrb[0].mxu0
  %v546 = vadd.f32 0.0, %v545
  %v547 = vpop.f32.mrb[0].mxu0
  %548 = vdwg.mxu0
  %v549 = vrcp.pop %v546
  %551 = vset.pattern.permute.xlu0 0
  %552 = vperm.xlu0 %551, %v549
  %v553 = vpop.permute.xlu0 %552
  %v555 = vmul.f32 %v476, %v553
  %v556 = vld [vmem:[%s4] sm:$0xff]
  %v557 = vld [vmem:[%s4 + $0x8] sm:$0xff]
  %v558 = vld [vmem:[%s4 + $0x10] sm:$0xff]
  %v559 = vld [vmem:[%s4 + $0x18] sm:$0xff]
  %v560 = vld [vmem:[%s4 + $0x20] sm:$0xff]
  %v561 = vld [vmem:[%s4 + $0x28] sm:$0xff]
  %v562 = vld [vmem:[%s4 + $0x30] sm:$0xff]
  %v563 = vld [vmem:[%s4 + $0x38] sm:$0xff]
  %v564 = vld [vmem:[%s4 + $0x40] sm:$0xff]
  %v565 = vld [vmem:[%s4 + $0x48] sm:$0xff]
  %v566 = vld [vmem:[%s4 + $0x50] sm:$0xff]
  %v567 = vld [vmem:[%s4 + $0x58] sm:$0xff]
  %v568 = vld [vmem:[%s4 + $0x60] sm:$0xff]
  %v569 = vld [vmem:[%s4 + $0x68] sm:$0xff]
  %v570 = vld [vmem:[%s4 + $0x70] sm:$0xff]
  %v571 = vld [vmem:[%s4 + $0x78] sm:$0xff]
  %v572 = vld [vmem:[%s4 + $0x80] sm:$0xff]
  %v573 = vld [vmem:[%s4 + $0x88] sm:$0xff]
  %v574 = vld [vmem:[%s4 + $0x90] sm:$0xff]
  %v575 = vld [vmem:[%s4 + $0x98] sm:$0xff]
  %v576 = vld [vmem:[%s4 + $0xa0] sm:$0xff]
  %v577 = vld [vmem:[%s4 + $0xa8] sm:$0xff]
  %v578 = vld [vmem:[%s4 + $0xb0] sm:$0xff]
  %v579 = vld [vmem:[%s4 + $0xb8] sm:$0xff]
  %v580 = vld [vmem:[%s4 + $0xc0] sm:$0xff]
  %v581 = vld [vmem:[%s4 + $0xc8] sm:$0xff]
  %v582 = vld [vmem:[%s4 + $0xd0] sm:$0xff]
  %v583 = vld [vmem:[%s4 + $0xd8] sm:$0xf]
  %v584 = vld [vmem:[%s1] sm:$0xff]
  %v585 = vld [vmem:[%s1 + $0x8] sm:$0xff]
  %v586 = vld [vmem:[%s1 + $0x10] sm:$0xff]
  %v587 = vld [vmem:[%s1 + $0x18] sm:$0xff]
  %588 = vset.pattern.permute.xlu0 0
  %589 = vperm.xlu0 %588, %v584
  %v590 = vpop.permute.xlu0 %589
  %591 = vset.pattern.permute.xlu0 0
  %592 = vperm.xlu0 %591, %v585
  %v593 = vpop.permute.xlu0 %592
  %594 = vset.pattern.permute.xlu0 0
  %595 = vperm.xlu0 %594, %v586
  %v596 = vpop.permute.xlu0 %595
  %597 = vset.pattern.permute.xlu0 0
  %598 = vperm.xlu0 %597, %v587
  %v599 = vpop.permute.xlu0 %598
  %vm600 = vcmp.eq.s32.totalorder %v99, %v590
  %vm601 = vcmp.eq.s32.totalorder %v100, %v590
  %vm602 = vcmp.eq.s32.totalorder %v99, %v593
  %vm603 = vcmp.eq.s32.totalorder %v100, %v593
  %vm604 = vcmp.eq.s32.totalorder %v99, %v596
  %vm605 = vcmp.eq.s32.totalorder %v100, %v596
  %vm606 = vcmp.eq.s32.totalorder %v99, %v599
  %vm607 = vcmp.eq.s32.totalorder %v100, %v599
  %v608 = vsel %vm600, 1, 0
  %v609 = vsel %vm601, 1, 0
  %v610 = vsel %vm602, 1, 0
  %v611 = vsel %vm603, 1, 0
  %v612 = vsel %vm604, 1, 0
  %v613 = vsel %vm605, 1, 0
  %v614 = vsel %vm606, 1, 0
  %v615 = vsel %vm607, 1, 0
  %v616 = vcvt.s32.f32 %v608
  %v617 = vcvt.s32.f32 %v609
  %v618 = vcvt.s32.f32 %v610
  %v619 = vcvt.s32.f32 %v611
  %v620 = vcvt.s32.f32 %v612
  %v621 = vcvt.s32.f32 %v613
  %v622 = vcvt.s32.f32 %v614
  %v623 = vcvt.s32.f32 %v615
  %vm624 = vcmask 752640
  %v626 = vsel %vm624, %v617, 0
  %v629 = vsel %vm624, %v619, 0
  %v632 = vsel %vm624, %v621, 0
  %v635 = vsel %vm624, %v623, 0
  %vm637 = vcmask 1043456
  %v639 = vsel %vm637, %v583, 0
  %641 = vmatprep.subr.mxu0 0.0
  %642 = vmatpush1.msra.mxu0 %v556
  %643 = vmatprep.subr.mxu0 0.0
  %644 = vmatpush1.msra.mxu0 %v557
  %645 = vmatprep.subr.mxu0 0.0
  %646 = vmatpush1.msra.mxu0 %v558
  %647 = vmatprep.subr.mxu0 0.0
  %648 = vmatpush1.msra.mxu0 %v559
  %649 = vmatprep.subr.mxu0 0.0
  %650 = vmatpush1.msra.mxu0 %v560
  %651 = vmatprep.subr.mxu0 0.0
  %652 = vmatpush1.msra.mxu0 %v561
  %653 = vmatprep.subr.mxu0 0.0
  %654 = vmatpush1.msra.mxu0 %v562
  %655 = vmatprep.subr.mxu0 0.0
  %656 = vmatpush1.msra.mxu0 %v563
  %657 = vmatprep.subr.mxu0 0.0
  %658 = vmatpush1.msra.mxu0 %v564
  %659 = vmatprep.subr.mxu0 0.0
  %660 = vmatpush1.msra.mxu0 %v565
  %661 = vmatprep.subr.mxu0 0.0
  %662 = vmatpush1.msra.mxu0 %v566
  %663 = vmatprep.subr.mxu0 0.0
  %664 = vmatpush1.msra.mxu0 %v567
  %665 = vmatprep.subr.mxu0 0.0
  %666 = vmatpush1.msra.mxu0 %v568
  %667 = vmatprep.subr.mxu0 0.0
  %668 = vmatpush1.msra.mxu0 %v569
  %669 = vmatprep.subr.mxu0 0.0
  %670 = vmatpush1.msra.mxu0 %v570
  %671 = vmatprep.subr.mxu0 0.0
  %672 = vmatpush1.msra.mxu0 %v571
  %673 = vmatprep.subr.mxu0 0.0
  %674 = vmatpush1.msra.mxu0 %v572
  %675 = vmatprep.subr.mxu0 0.0
  %676 = vmatpush1.msra.mxu0 %v573
  %677 = vmatprep.subr.mxu0 0.0
  %678 = vmatpush1.msra.mxu0 %v574
  %679 = vmatprep.subr.mxu0 0.0
  %680 = vmatpush1.msra.mxu0 %v575
  %681 = vmatprep.subr.mxu0 0.0
  %682 = vmatpush1.msra.mxu0 %v576
  %683 = vmatprep.subr.mxu0 0.0
  %684 = vmatpush1.msra.mxu0 %v577
  %685 = vmatprep.subr.mxu0 0.0
  %686 = vmatpush1.msra.mxu0 %v578
  %687 = vmatprep.subr.mxu0 0.0
  %688 = vmatpush1.msra.mxu0 %v579
  %689 = vmatprep.subr.mxu0 0.0
  %690 = vmatpush1.msra.mxu0 %v580
  %691 = vmatprep.subr.mxu0 0.0
  %692 = vmatpush1.msra.mxu0 %v581
  %693 = vmatprep.subr.mxu0 0.0
  %694 = vmatpush1.msra.mxu0 %v582
  %695 = vmatprep.subr.mxu0 0.0
  %696 = vmatpush1.msra.mxu0 %v639
  %697 = vmatprep.subr.mxu0 0.0
  %698 = vmatpush1.msra.mxu0 0.0
  %699 = vmatprep.subr.mxu0 0.0
  %700 = vmatpush1.msra.mxu0 0.0
  %701 = vmatprep.subr.mxu0 0.0
  %702 = vmatpush1.msra.mxu0 0.0
  %703 = vmatprep.subr.mxu0 0.0
  %704 = vmatpush1.msra.mxu0 0.0
  %705 = vmatprep.mubr.f32.mxu0 %v626
  %706 = vmatmul.mubr.f32.gmra.mrb[0].mxu0 %v616
  %v707 = vpop.f32.mrb[0].mxu0
  %v708 = vadd.f32 0.0, %v707
  %v709 = vpop.f32.mrb[0].mxu0
  %710 = vmatprep.mubr.f32.mxu0 %v629
  %711 = vmatmul.mubr.f32.gmra.mrb[0].mxu0 %v618
  %v712 = vpop.f32.mrb[0].mxu0
  %v713 = vadd.f32 0.0, %v712
  %v714 = vpop.f32.mrb[0].mxu0
  %715 = vmatprep.mubr.f32.mxu0 %v632
  %716 = vmatmul.mubr.f32.gmra.mrb[0].mxu0 %v620
  %v717 = vpop.f32.mrb[0].mxu0
  %v718 = vadd.f32 0.0, %v717
  %v719 = vpop.f32.mrb[0].mxu0
  %720 = vmatprep.mubr.f32.mxu0 %v635
  %721 = vmatmul.mubr.f32.gmra.mrb[0].mxu0 %v622
  %v722 = vpop.f32.mrb[0].mxu0
  %v723 = vadd.f32 0.0, %v722
  %v724 = vpop.f32.mrb[0].mxu0
  %725 = vdwg.mxu0
  %v726 = vld [vmem:[%s9] sm:$0xff]
  %v727 = vld [vmem:[%s9 + $0x8] sm:$0xff]
  %v728 = vld [vmem:[%s10] sm:$0x1]
  %v730 = vlaneseq
  %v731 = vshrl.u32 %v730, 7
  %v732 = vsub.s32 0, %v731
  %v733 = vrot.slane %v728, %v732
  %v736 = vsel %vm359, %v708, 0
  %v739 = vsel %vm359, %v713, 0
  %v742 = vsel %vm359, %v718, 0
  %v745 = vsel %vm359, %v723, 0
  %747 = vmatprep.subr.mxu0 0.0
  %748 = vmatpush1.msra.mxu0 %v726
  %749 = vmatprep.subr.mxu0 0.0
  %750 = vmatpush1.msra.mxu0 %v727
  %751 = vmatprep.subr.mxu0 0.0
  %752 = vmatpush1.msra.mxu0 0.0
  %753 = vmatprep.subr.mxu0 0.0
  %754 = vmatpush1.msra.mxu0 0.0
  %755 = vmatprep.subr.mxu0 0.0
  %756 = vmatpush1.msra.mxu0 0.0
  %757 = vmatprep.subr.mxu0 0.0
  %758 = vmatpush1.msra.mxu0 0.0
  %759 = vmatprep.subr.mxu0 0.0
  %760 = vmatpush1.msra.mxu0 0.0
  %761 = vmatprep.subr.mxu0 0.0
  %762 = vmatpush1.msra.mxu0 0.0
  %763 = vmatprep.subr.mxu0 0.0
  %764 = vmatpush1.msra.mxu0 0.0
  %765 = vmatprep.subr.mxu0 0.0
  %766 = vmatpush1.msra.mxu0 0.0
  %767 = vmatprep.subr.mxu0 0.0
  %768 = vmatpush1.msra.mxu0 0.0
  %769 = vmatprep.subr.mxu0 0.0
  %770 = vmatpush1.msra.mxu0 0.0
  %771 = vmatprep.subr.mxu0 0.0
  %772 = vmatpush1.msra.mxu0 0.0
  %773 = vmatprep.subr.mxu0 0.0
  %774 = vmatpush1.msra.mxu0 0.0
  %775 = vmatprep.subr.mxu0 0.0
  %776 = vmatpush1.msra.mxu0 0.0
  %777 = vmatprep.subr.mxu0 0.0
  %778 = vmatpush1.msra.mxu0 0.0
  %779 = vmatprep.subr.mxu0 0.0
  %780 = vmatpush1.msra.mxu0 0.0
  %781 = vmatprep.subr.mxu0 0.0
  %782 = vmatpush1.msra.mxu0 0.0
  %783 = vmatprep.subr.mxu0 0.0
  %784 = vmatpush1.msra.mxu0 0.0
  %785 = vmatprep.subr.mxu0 0.0
  %786 = vmatpush1.msra.mxu0 0.0
  %787 = vmatprep.subr.mxu0 0.0
  %788 = vmatpush1.msra.mxu0 0.0
  %789 = vmatprep.subr.mxu0 0.0
  %790 = vmatpush1.msra.mxu0 0.0
  %791 = vmatprep.subr.mxu0 0.0
  %792 = vmatpush1.msra.mxu0 0.0
  %793 = vmatprep.subr.mxu0 0.0
  %794 = vmatpush1.msra.mxu0 0.0
  %795 = vmatprep.subr.mxu0 0.0
  %796 = vmatpush1.msra.mxu0 0.0
  %797 = vmatprep.subr.mxu0 0.0
  %798 = vmatpush1.msra.mxu0 0.0
  %799 = vmatprep.subr.mxu0 0.0
  %800 = vmatpush1.msra.mxu0 0.0
  %801 = vmatprep.subr.mxu0 0.0
  %802 = vmatpush1.msra.mxu0 0.0
  %803 = vmatprep.subr.mxu0 0.0
  %804 = vmatpush1.msra.mxu0 0.0
  %805 = vmatprep.subr.mxu0 0.0
  %806 = vmatpush1.msra.mxu0 0.0
  %807 = vmatprep.subr.mxu0 0.0
  %808 = vmatpush1.msra.mxu0 0.0
  %809 = vmatprep.subr.mxu0 0.0
  %810 = vmatpush1.msra.mxu0 0.0
  %811 = vmatprep.mubr.f32.mxu0 0.0
  %812 = vmatmul.mubr.f32.gmra.mrb[0].mxu0 %v736
  %v813 = vpop.f32.mrb[0].mxu0
  %v814 = vadd.f32 %v733, %v813
  %v815 = vpop.f32.mrb[0].mxu0
  %816 = vmatprep.mubr.f32.mxu0 0.0
  %817 = vmatmul.mubr.f32.gmra.mrb[0].mxu0 %v739
  %v818 = vpop.f32.mrb[0].mxu0
  %v819 = vadd.f32 %v733, %v818
  %v820 = vpop.f32.mrb[0].mxu0
  %821 = vmatprep.mubr.f32.mxu0 0.0
  %822 = vmatmul.mubr.f32.gmra.mrb[0].mxu0 %v742
  %v823 = vpop.f32.mrb[0].mxu0
  %v824 = vadd.f32 %v733, %v823
  %v825 = vpop.f32.mrb[0].mxu0
  %826 = vmatprep.mubr.f32.mxu0 0.0
  %827 = vmatmul.mubr.f32.gmra.mrb[0].mxu0 %v745
  %v828 = vpop.f32.mrb[0].mxu0
  %v829 = vadd.f32 %v733, %v828
  %v830 = vpop.f32.mrb[0].mxu0
  %831 = vdwg.mxu0
  %v832 = vtanh.pop %v814
  %v833 = vtanh.pop %v819
  %v834 = vtanh.pop %v824
  %v835 = vtanh.pop %v829
  %v836 = vld [vmem:[%s11] sm:$0x1]
  %v838 = vlaneseq
  %v839 = vshrl.u32 %v838, 7
  %v840 = vsub.s32 0, %v839
  %v841 = vrot.slane %v836, %v840
  %v843 = vmul.f32 %v832, %v841
  %v844 = vmul.f32 %v833, %v841
  %v845 = vmul.f32 %v834, %v841
  %v846 = vmul.f32 %v835, %v841
  %vm847 = vcmask 64512
  %v848 = vsel %vm847, %v843, 0.0
  %849 = vadd.xlane.f32.xlu0 %v848
  %v850 = vpop.xlane.xlu0 %849
  %v851 = vsel %vm847, %v844, 0.0
  %852 = vadd.xlane.f32.xlu0 %v851
  %v853 = vpop.xlane.xlu0 %852
  %v854 = vsel %vm847, %v845, 0.0
  %855 = vadd.xlane.f32.xlu0 %v854
  %v856 = vpop.xlane.xlu0 %855
  %v857 = vsel %vm847, %v846, 0.0
  %858 = vadd.xlane.f32.xlu0 %v857
  %v859 = vpop.xlane.xlu0 %858
  %v860 = vmax.f32 %v850, %v853
  %v861 = vmax.f32 %v856, %v859
  %v862 = vmax.f32 %v860, %v861
  %v863 = vrot.slane %v862, 4
  %v864 = vmax.f32 %v862, %v863
  %v865 = vrot.slane %v864, 2
  %v866 = vmax.f32 %v864, %v865
  %v867 = vrot.slane %v866, 1
  %v868 = vmax.f32 %v866, %v867
  %v869 = vsub.f32 %v850, %v868
  %v870 = vsub.f32 %v853, %v868
  %v871 = vsub.f32 %v856, %v868
  %v872 = vsub.f32 %v859, %v868
  %v873 = vmul.f32 %v869, 1.442695
  %v874 = vpow.pop %v873
  %v875 = vmul.f32 %v870, 1.442695
  %v876 = vpow.pop %v875
  %v877 = vmul.f32 %v871, 1.442695
  %v878 = vpow.pop %v877
  %v879 = vmul.f32 %v872, 1.442695
  %v880 = vpow.pop %v879
  %v881 = vmul.f32 %v708, %v874
  %v882 = vmul.f32 %v713, %v876
  %v883 = vmul.f32 %v718, %v878
  %v884 = vmul.f32 %v723, %v880
  %885 = vmatprep.subr.mxu0 0.0
  %886 = vmatpush1.msra.mxu0 %v881
  %887 = vmatprep.subr.mxu0 0.0
  %888 = vmatpush1.msra.mxu0 %v882
  %889 = vmatprep.subr.mxu0 0.0
  %890 = vmatpush1.msra.mxu0 %v883
  %891 = vmatprep.subr.mxu0 0.0
  %892 = vmatpush1.msra.mxu0 %v884
  %893 = vmatprep.subr.mxu0 0.0
  %894 = vmatpush1.msra.mxu0 0.0
  %895 = vmatprep.subr.mxu0 0.0
  %896 = vmatpush1.msra.mxu0 0.0
  %897 = vmatprep.subr.mxu0 0.0
  %898 = vmatpush1.msra.mxu0 0.0
  %899 = vmatprep.subr.mxu0 0.0
  %900 = vmatpush1.msra.mxu0 0.0
  %901 = vmatprep.subr.mxu0 0.0
  %902 = vmatpush1.msra.mxu0 0.0
  %903 = vmatprep.subr.mxu0 0.0
  %904 = vmatpush1.msra.mxu0 0.0
  %905 = vmatprep.subr.mxu0 0.0
  %906 = vmatpush1.msra.mxu0 0.0
  %907 = vmatprep.subr.mxu0 0.0
  %908 = vmatpush1.msra.mxu0 0.0
  %909 = vmatprep.subr.mxu0 0.0
  %910 = vmatpush1.msra.mxu0 0.0
  %911 = vmatprep.subr.mxu0 0.0
  %912 = vmatpush1.msra.mxu0 0.0
  %913 = vmatprep.subr.mxu0 0.0
  %914 = vmatpush1.msra.mxu0 0.0
  %915 = vmatprep.subr.mxu0 0.0
  %916 = vmatpush1.msra.mxu0 0.0
  %917 = vmatprep.subr.mxu0 0.0
  %918 = vmatpush1.msra.mxu0 0.0
  %919 = vmatprep.subr.mxu0 0.0
  %920 = vmatpush1.msra.mxu0 0.0
  %921 = vmatprep.subr.mxu0 0.0
  %922 = vmatpush1.msra.mxu0 0.0
  %923 = vmatprep.subr.mxu0 0.0
  %924 = vmatpush1.msra.mxu0 0.0
  %925 = vmatprep.subr.mxu0 0.0
  %926 = vmatpush1.msra.mxu0 0.0
  %927 = vmatprep.subr.mxu0 0.0
  %928 = vmatpush1.msra.mxu0 0.0
  %929 = vmatprep.subr.mxu0 0.0
  %930 = vmatpush1.msra.mxu0 0.0
  %931 = vmatprep.subr.mxu0 0.0
  %932 = vmatpush1.msra.mxu0 0.0
  %933 = vmatprep.subr.mxu0 0.0
  %934 = vmatpush1.msra.mxu0 0.0
  %935 = vmatprep.subr.mxu0 0.0
  %936 = vmatpush1.msra.mxu0 0.0
  %937 = vmatprep.subr.mxu0 0.0
  %938 = vmatpush1.msra.mxu0 0.0
  %939 = vmatprep.subr.mxu0 0.0
  %940 = vmatpush1.msra.mxu0 0.0
  %941 = vmatprep.subr.mxu0 0.0
  %942 = vmatpush1.msra.mxu0 0.0
  %943 = vmatprep.subr.mxu0 0.0
  %944 = vmatpush1.msra.mxu0 0.0
  %945 = vmatprep.subr.mxu0 0.0
  %946 = vmatpush1.msra.mxu0 0.0
  %947 = vmatprep.subr.mxu0 0.0
  %948 = vmatpush1.msra.mxu0 0.0
  %949 = vmatprep.mubr.f32.mxu0 0.0
  %950 = vmatmul.mubr.f32.gmra.mrb[0].mxu0 %v407
  %v951 = vpop.f32.mrb[0].mxu0
  %v952 = vadd.f32 0.0, %v951
  %v953 = vpop.f32.mrb[0].mxu0
  %954 = vdwg.mxu0
  %955 = vmatprep.subr.mxu0 0.0
  %956 = vmatpush1.msra.mxu0 %v874
  %957 = vmatprep.subr.mxu0 0.0
  %958 = vmatpush1.msra.mxu0 %v876
  %959 = vmatprep.subr.mxu0 0.0
  %960 = vmatpush1.msra.mxu0 %v878
  %961 = vmatprep.subr.mxu0 0.0
  %962 = vmatpush1.msra.mxu0 %v880
  %963 = vmatprep.subr.mxu0 0.0
  %964 = vmatpush1.msra.mxu0 0.0
  %965 = vmatprep.subr.mxu0 0.0
  %966 = vmatpush1.msra.mxu0 0.0
  %967 = vmatprep.subr.mxu0 0.0
  %968 = vmatpush1.msra.mxu0 0.0
  %969 = vmatprep.subr.mxu0 0.0
  %970 = vmatpush1.msra.mxu0 0.0
  %971 = vmatprep.subr.mxu0 0.0
  %972 = vmatpush1.msra.mxu0 0.0
  %973 = vmatprep.subr.mxu0 0.0
  %974 = vmatpush1.msra.mxu0 0.0
  %975 = vmatprep.subr.mxu0 0.0
  %976 = vmatpush1.msra.mxu0 0.0
  %977 = vmatprep.subr.mxu0 0.0
  %978 = vmatpush1.msra.mxu0 0.0
  %979 = vmatprep.subr.mxu0 0.0
  %980 = vmatpush1.msra.mxu0 0.0
  %981 = vmatprep.subr.mxu0 0.0
  %982 = vmatpush1.msra.mxu0 0.0
  %983 = vmatprep.subr.mxu0 0.0
  %984 = vmatpush1.msra.mxu0 0.0
  %985 = vmatprep.subr.mxu0 0.0
  %986 = vmatpush1.msra.mxu0 0.0
  %987 = vmatprep.subr.mxu0 0.0
  %988 = vmatpush1.msra.mxu0 0.0
  %989 = vmatprep.subr.mxu0 0.0
  %990 = vmatpush1.msra.mxu0 0.0
  %991 = vmatprep.subr.mxu0 0.0
  %992 = vmatpush1.msra.mxu0 0.0
  %993 = vmatprep.subr.mxu0 0.0
  %994 = vmatpush1.msra.mxu0 0.0
  %995 = vmatprep.subr.mxu0 0.0
  %996 = vmatpush1.msra.mxu0 0.0
  %997 = vmatprep.subr.mxu0 0.0
  %998 = vmatpush1.msra.mxu0 0.0
  %999 = vmatprep.subr.mxu0 0.0
  %1000 = vmatpush1.msra.mxu0 0.0
  %1001 = vmatprep.subr.mxu0 0.0
  %1002 = vmatpush1.msra.mxu0 0.0
  %1003 = vmatprep.subr.mxu0 0.0
  %1004 = vmatpush1.msra.mxu0 0.0
  %1005 = vmatprep.subr.mxu0 0.0
  %1006 = vmatpush1.msra.mxu0 0.0
  %1007 = vmatprep.subr.mxu0 0.0
  %1008 = vmatpush1.msra.mxu0 0.0
  %1009 = vmatprep.subr.mxu0 0.0
  %1010 = vmatpush1.msra.mxu0 0.0
  %1011 = vmatprep.subr.mxu0 0.0
  %1012 = vmatpush1.msra.mxu0 0.0
  %1013 = vmatprep.subr.mxu0 0.0
  %1014 = vmatpush1.msra.mxu0 0.0
  %1015 = vmatprep.subr.mxu0 0.0
  %1016 = vmatpush1.msra.mxu0 0.0
  %1017 = vmatprep.subr.mxu0 0.0
  %1018 = vmatpush1.msra.mxu0 0.0
  %1019 = vmatprep.mubr.f32.mxu0 0.0
  %1020 = vmatmul.mubr.f32.gmra.mrb[0].mxu0 %v407
  %v1021 = vpop.f32.mrb[0].mxu0
  %v1022 = vadd.f32 0.0, %v1021
  %v1023 = vpop.f32.mrb[0].mxu0
  %1024 = vdwg.mxu0
  %v1025 = vrcp.pop %v1022
  %1027 = vset.pattern.permute.xlu0 0
  %1028 = vperm.xlu0 %1027, %v1025
  %v1029 = vpop.permute.xlu0 %1028
  %v1031 = vmul.f32 %v952, %v1029
  %v1032 = vld [vmem:[%s5] sm:$0xff]
  %v1033 = vld [vmem:[%s5 + $0x8] sm:$0xff]
  %v1034 = vld [vmem:[%s5 + $0x10] sm:$0xff]
  %v1035 = vld [vmem:[%s5 + $0x18] sm:$0x3f]
  %v1036 = vld [vmem:[%s2] sm:$0xff]
  %v1037 = vld [vmem:[%s2 + $0x8] sm:$0xff]
  %1038 = vset.pattern.permute.xlu0 0
  %1039 = vperm.xlu0 %1038, %v1036
  %v1040 = vpop.permute.xlu0 %1039
  %1041 = vset.pattern.permute.xlu0 0
  %1042 = vperm.xlu0 %1041, %v1037
  %v1043 = vpop.permute.xlu0 %1042
  %vm1044 = vcmp.eq.s32.totalorder %v99, %v1040
  %vm1045 = vcmp.eq.s32.totalorder %v99, %v1043
  %v1046 = vsel %vm1044, 1, 0
  %v1047 = vsel %vm1045, 1, 0
  %v1048 = vcvt.s32.f32 %v1046
  %v1049 = vcvt.s32.f32 %v1047
  %vm1050 = vcmask 244736
  %v1052 = vsel %vm1050, %v1048, 0
  %v1055 = vsel %vm1050, %v1049, 0
  %vm1057 = vcmask 1045504
  %v1059 = vsel %vm1057, %v1035, 0
  %1061 = vmatprep.subr.mxu0 0.0
  %1062 = vmatpush1.msra.mxu0 %v1032
  %1063 = vmatprep.subr.mxu0 0.0
  %1064 = vmatpush1.msra.mxu0 %v1033
  %1065 = vmatprep.subr.mxu0 0.0
  %1066 = vmatpush1.msra.mxu0 %v1034
  %1067 = vmatprep.subr.mxu0 0.0
  %1068 = vmatpush1.msra.mxu0 %v1059
  %1069 = vmatprep.subr.mxu0 0.0
  %1070 = vmatpush1.msra.mxu0 0.0
  %1071 = vmatprep.subr.mxu0 0.0
  %1072 = vmatpush1.msra.mxu0 0.0
  %1073 = vmatprep.subr.mxu0 0.0
  %1074 = vmatpush1.msra.mxu0 0.0
  %1075 = vmatprep.subr.mxu0 0.0
  %1076 = vmatpush1.msra.mxu0 0.0
  %1077 = vmatprep.subr.mxu0 0.0
  %1078 = vmatpush1.msra.mxu0 0.0
  %1079 = vmatprep.subr.mxu0 0.0
  %1080 = vmatpush1.msra.mxu0 0.0
  %1081 = vmatprep.subr.mxu0 0.0
  %1082 = vmatpush1.msra.mxu0 0.0
  %1083 = vmatprep.subr.mxu0 0.0
  %1084 = vmatpush1.msra.mxu0 0.0
  %1085 = vmatprep.subr.mxu0 0.0
  %1086 = vmatpush1.msra.mxu0 0.0
  %1087 = vmatprep.subr.mxu0 0.0
  %1088 = vmatpush1.msra.mxu0 0.0
  %1089 = vmatprep.subr.mxu0 0.0
  %1090 = vmatpush1.msra.mxu0 0.0
  %1091 = vmatprep.subr.mxu0 0.0
  %1092 = vmatpush1.msra.mxu0 0.0
  %1093 = vmatprep.subr.mxu0 0.0
  %1094 = vmatpush1.msra.mxu0 0.0
  %1095 = vmatprep.subr.mxu0 0.0
  %1096 = vmatpush1.msra.mxu0 0.0
  %1097 = vmatprep.subr.mxu0 0.0
  %1098 = vmatpush1.msra.mxu0 0.0
  %1099 = vmatprep.subr.mxu0 0.0
  %1100 = vmatpush1.msra.mxu0 0.0
  %1101 = vmatprep.subr.mxu0 0.0
  %1102 = vmatpush1.msra.mxu0 0.0
  %1103 = vmatprep.subr.mxu0 0.0
  %1104 = vmatpush1.msra.mxu0 0.0
  %1105 = vmatprep.subr.mxu0 0.0
  %1106 = vmatpush1.msra.mxu0 0.0
  %1107 = vmatprep.subr.mxu0 0.0
  %1108 = vmatpush1.msra.mxu0 0.0
  %1109 = vmatprep.subr.mxu0 0.0
  %1110 = vmatpush1.msra.mxu0 0.0
  %1111 = vmatprep.subr.mxu0 0.0
  %1112 = vmatpush1.msra.mxu0 0.0
  %1113 = vmatprep.subr.mxu0 0.0
  %1114 = vmatpush1.msra.mxu0 0.0
  %1115 = vmatprep.subr.mxu0 0.0
  %1116 = vmatpush1.msra.mxu0 0.0
  %1117 = vmatprep.subr.mxu0 0.0
  %1118 = vmatpush1.msra.mxu0 0.0
  %1119 = vmatprep.subr.mxu0 0.0
  %1120 = vmatpush1.msra.mxu0 0.0
  %1121 = vmatprep.subr.mxu0 0.0
  %1122 = vmatpush1.msra.mxu0 0.0
  %1123 = vmatprep.subr.mxu0 0.0
  %1124 = vmatpush1.msra.mxu0 0.0
  %1125 = vmatprep.mubr.f32.mxu0 0.0
  %1126 = vmatmul.mubr.f32.gmra.mrb[0].mxu0 %v1052
  %v1127 = vpop.f32.mrb[0].mxu0
  %v1128 = vadd.f32 0.0, %v1127
  %v1129 = vpop.f32.mrb[0].mxu0
  %1130 = vmatprep.mubr.f32.mxu0 0.0
  %1131 = vmatmul.mubr.f32.gmra.mrb[0].mxu0 %v1055
  %v1132 = vpop.f32.mrb[0].mxu0
  %v1133 = vadd.f32 0.0, %v1132
  %v1134 = vpop.f32.mrb[0].mxu0
  %1135 = vdwg.mxu0
  %v1136 = vld [vmem:[%s12] sm:$0xff]
  %v1137 = vld [vmem:[%s12 + $0x8] sm:$0xff]
  %v1138 = vld [vmem:[%s13] sm:$0x1]
  %v1140 = vlaneseq
  %v1141 = vshrl.u32 %v1140, 7
  %v1142 = vsub.s32 0, %v1141
  %v1143 = vrot.slane %v1138, %v1142
  %v1146 = vsel %vm359, %v1128, 0
  %v1149 = vsel %vm359, %v1133, 0
  %1151 = vmatprep.subr.mxu0 0.0
  %1152 = vmatpush1.msra.mxu0 %v1136
  %1153 = vmatprep.subr.mxu0 0.0
  %1154 = vmatpush1.msra.mxu0 %v1137
  %1155 = vmatprep.subr.mxu0 0.0
  %1156 = vmatpush1.msra.mxu0 0.0
  %1157 = vmatprep.subr.mxu0 0.0
  %1158 = vmatpush1.msra.mxu0 0.0
  %1159 = vmatprep.subr.mxu0 0.0
  %1160 = vmatpush1.msra.mxu0 0.0
  %1161 = vmatprep.subr.mxu0 0.0
  %1162 = vmatpush1.msra.mxu0 0.0
  %1163 = vmatprep.subr.mxu0 0.0
  %1164 = vmatpush1.msra.mxu0 0.0
  %1165 = vmatprep.subr.mxu0 0.0
  %1166 = vmatpush1.msra.mxu0 0.0
  %1167 = vmatprep.subr.mxu0 0.0
  %1168 = vmatpush1.msra.mxu0 0.0
  %1169 = vmatprep.subr.mxu0 0.0
  %1170 = vmatpush1.msra.mxu0 0.0
  %1171 = vmatprep.subr.mxu0 0.0
  %1172 = vmatpush1.msra.mxu0 0.0
  %1173 = vmatprep.subr.mxu0 0.0
  %1174 = vmatpush1.msra.mxu0 0.0
  %1175 = vmatprep.subr.mxu0 0.0
  %1176 = vmatpush1.msra.mxu0 0.0
  %1177 = vmatprep.subr.mxu0 0.0
  %1178 = vmatpush1.msra.mxu0 0.0
  %1179 = vmatprep.subr.mxu0 0.0
  %1180 = vmatpush1.msra.mxu0 0.0
  %1181 = vmatprep.subr.mxu0 0.0
  %1182 = vmatpush1.msra.mxu0 0.0
  %1183 = vmatprep.subr.mxu0 0.0
  %1184 = vmatpush1.msra.mxu0 0.0
  %1185 = vmatprep.subr.mxu0 0.0
  %1186 = vmatpush1.msra.mxu0 0.0
  %1187 = vmatprep.subr.mxu0 0.0
  %1188 = vmatpush1.msra.mxu0 0.0
  %1189 = vmatprep.subr.mxu0 0.0
  %1190 = vmatpush1.msra.mxu0 0.0
  %1191 = vmatprep.subr.mxu0 0.0
  %1192 = vmatpush1.msra.mxu0 0.0
  %1193 = vmatprep.subr.mxu0 0.0
  %1194 = vmatpush1.msra.mxu0 0.0
  %1195 = vmatprep.subr.mxu0 0.0
  %1196 = vmatpush1.msra.mxu0 0.0
  %1197 = vmatprep.subr.mxu0 0.0
  %1198 = vmatpush1.msra.mxu0 0.0
  %1199 = vmatprep.subr.mxu0 0.0
  %1200 = vmatpush1.msra.mxu0 0.0
  %1201 = vmatprep.subr.mxu0 0.0
  %1202 = vmatpush1.msra.mxu0 0.0
  %1203 = vmatprep.subr.mxu0 0.0
  %1204 = vmatpush1.msra.mxu0 0.0
  %1205 = vmatprep.subr.mxu0 0.0
  %1206 = vmatpush1.msra.mxu0 0.0
  %1207 = vmatprep.subr.mxu0 0.0
  %1208 = vmatpush1.msra.mxu0 0.0
  %1209 = vmatprep.subr.mxu0 0.0
  %1210 = vmatpush1.msra.mxu0 0.0
  %1211 = vmatprep.subr.mxu0 0.0
  %1212 = vmatpush1.msra.mxu0 0.0
  %1213 = vmatprep.subr.mxu0 0.0
  %1214 = vmatpush1.msra.mxu0 0.0
  %1215 = vmatprep.mubr.f32.mxu0 0.0
  %1216 = vmatmul.mubr.f32.gmra.mrb[0].mxu0 %v1146
  %v1217 = vpop.f32.mrb[0].mxu0
  %v1218 = vadd.f32 %v1143, %v1217
  %v1219 = vpop.f32.mrb[0].mxu0
  %1220 = vmatprep.mubr.f32.mxu0 0.0
  %1221 = vmatmul.mubr.f32.gmra.mrb[0].mxu0 %v1149
  %v1222 = vpop.f32.mrb[0].mxu0
  %v1223 = vadd.f32 %v1143, %v1222
  %v1224 = vpop.f32.mrb[0].mxu0
  %1225 = vdwg.mxu0
  %v1226 = vtanh.pop %v1218
  %v1227 = vtanh.pop %v1223
  %v1228 = vld [vmem:[%s14] sm:$0x1]
  %v1230 = vlaneseq
  %v1231 = vshrl.u32 %v1230, 7
  %v1232 = vsub.s32 0, %v1231
  %v1233 = vrot.slane %v1228, %v1232
  %v1235 = vmul.f32 %v1226, %v1233
  %v1236 = vmul.f32 %v1227, %v1233
  %v1237 = vsel %vm847, %v1235, 0.0
  %1238 = vadd.xlane.f32.xlu0 %v1237
  %v1239 = vpop.xlane.xlu0 %1238
  %v1240 = vsel %vm847, %v1236, 0.0
  %1241 = vadd.xlane.f32.xlu0 %v1240
  %v1242 = vpop.xlane.xlu0 %1241
  %v1243 = vmax.f32 %v1239, %v1242
  %v1244 = vrot.slane %v1243, 4
  %v1245 = vmax.f32 %v1243, %v1244
  %v1246 = vrot.slane %v1245, 2
  %v1247 = vmax.f32 %v1245, %v1246
  %v1248 = vrot.slane %v1247, 1
  %v1249 = vmax.f32 %v1247, %v1248
  %v1250 = vsub.f32 %v1239, %v1249
  %v1251 = vsub.f32 %v1242, %v1249
  %v1252 = vmul.f32 %v1250, 1.442695
  %v1253 = vpow.pop %v1252
  %v1254 = vmul.f32 %v1251, 1.442695
  %v1255 = vpow.pop %v1254
  %v1256 = vmul.u32 %v394, 4
  %vm1257 = vcmp.ge.s32.totalorder %v99, %v1256
  %v1258 = vadd.s32 %v1256, 4
  %vm1259 = vcmp.lt.s32.totalorder %v99, %v1258
  %vm1260 = vmand %vm1257, %vm1259
  %v1261 = vsel %vm1260, 1, 0
  %v1262 = vcvt.s32.f32 %v1261
  %v1263 = vmul.f32 %v1128, %v1253
  %v1264 = vmul.f32 %v1133, %v1255
  %v1266 = vsel %vm359, %v1262, 0
  %1268 = vmatprep.subr.mxu0 0.0
  %1269 = vmatpush1.msra.mxu0 %v1263
  %1270 = vmatprep.subr.mxu0 0.0
  %1271 = vmatpush1.msra.mxu0 %v1264
  %1272 = vmatprep.subr.mxu0 0.0
  %1273 = vmatpush1.msra.mxu0 0.0
  %1274 = vmatprep.subr.mxu0 0.0
  %1275 = vmatpush1.msra.mxu0 0.0
  %1276 = vmatprep.subr.mxu0 0.0
  %1277 = vmatpush1.msra.mxu0 0.0
  %1278 = vmatprep.subr.mxu0 0.0
  %1279 = vmatpush1.msra.mxu0 0.0
  %1280 = vmatprep.subr.mxu0 0.0
  %1281 = vmatpush1.msra.mxu0 0.0
  %1282 = vmatprep.subr.mxu0 0.0
  %1283 = vmatpush1.msra.mxu0 0.0
  %1284 = vmatprep.subr.mxu0 0.0
  %1285 = vmatpush1.msra.mxu0 0.0
  %1286 = vmatprep.subr.mxu0 0.0
  %1287 = vmatpush1.msra.mxu0 0.0
  %1288 = vmatprep.subr.mxu0 0.0
  %1289 = vmatpush1.msra.mxu0 0.0
  %1290 = vmatprep.subr.mxu0 0.0
  %1291 = vmatpush1.msra.mxu0 0.0
  %1292 = vmatprep.subr.mxu0 0.0
  %1293 = vmatpush1.msra.mxu0 0.0
  %1294 = vmatprep.subr.mxu0 0.0
  %1295 = vmatpush1.msra.mxu0 0.0
  %1296 = vmatprep.subr.mxu0 0.0
  %1297 = vmatpush1.msra.mxu0 0.0
  %1298 = vmatprep.subr.mxu0 0.0
  %1299 = vmatpush1.msra.mxu0 0.0
  %1300 = vmatprep.subr.mxu0 0.0
  %1301 = vmatpush1.msra.mxu0 0.0
  %1302 = vmatprep.subr.mxu0 0.0
  %1303 = vmatpush1.msra.mxu0 0.0
  %1304 = vmatprep.subr.mxu0 0.0
  %1305 = vmatpush1.msra.mxu0 0.0
  %1306 = vmatprep.subr.mxu0 0.0
  %1307 = vmatpush1.msra.mxu0 0.0
  %1308 = vmatprep.subr.mxu0 0.0
  %1309 = vmatpush1.msra.mxu0 0.0
  %1310 = vmatprep.subr.mxu0 0.0
  %1311 = vmatpush1.msra.mxu0 0.0
  %1312 = vmatprep.subr.mxu0 0.0
  %1313 = vmatpush1.msra.mxu0 0.0
  %1314 = vmatprep.subr.mxu0 0.0
  %1315 = vmatpush1.msra.mxu0 0.0
  %1316 = vmatprep.subr.mxu0 0.0
  %1317 = vmatpush1.msra.mxu0 0.0
  %1318 = vmatprep.subr.mxu0 0.0
  %1319 = vmatpush1.msra.mxu0 0.0
  %1320 = vmatprep.subr.mxu0 0.0
  %1321 = vmatpush1.msra.mxu0 0.0
  %1322 = vmatprep.subr.mxu0 0.0
  %1323 = vmatpush1.msra.mxu0 0.0
  %1324 = vmatprep.subr.mxu0 0.0
  %1325 = vmatpush1.msra.mxu0 0.0
  %1326 = vmatprep.subr.mxu0 0.0
  %1327 = vmatpush1.msra.mxu0 0.0
  %1328 = vmatprep.subr.mxu0 0.0
  %1329 = vmatpush1.msra.mxu0 0.0
  %1330 = vmatprep.subr.mxu0 0.0
  %1331 = vmatpush1.msra.mxu0 0.0
  %1332 = vmatprep.mubr.f32.mxu0 0.0
  %1333 = vmatmul.mubr.f32.gmra.mrb[0].mxu0 %v1266
  %v1334 = vpop.f32.mrb[0].mxu0
  %v1335 = vadd.f32 0.0, %v1334
  %v1336 = vpop.f32.mrb[0].mxu0
  %1337 = vdwg.mxu0
  %1338 = vmatprep.subr.mxu0 0.0
  %1339 = vmatpush1.msra.mxu0 %v1253
  %1340 = vmatprep.subr.mxu0 0.0
  %1341 = vmatpush1.msra.mxu0 %v1255
  %1342 = vmatprep.subr.mxu0 0.0
  %1343 = vmatpush1.msra.mxu0 0.0
  %1344 = vmatprep.subr.mxu0 0.0
  %1345 = vmatpush1.msra.mxu0 0.0
  %1346 = vmatprep.subr.mxu0 0.0
  %1347 = vmatpush1.msra.mxu0 0.0
  %1348 = vmatprep.subr.mxu0 0.0
  %1349 = vmatpush1.msra.mxu0 0.0
  %1350 = vmatprep.subr.mxu0 0.0
  %1351 = vmatpush1.msra.mxu0 0.0
  %1352 = vmatprep.subr.mxu0 0.0
  %1353 = vmatpush1.msra.mxu0 0.0
  %1354 = vmatprep.subr.mxu0 0.0
  %1355 = vmatpush1.msra.mxu0 0.0
  %1356 = vmatprep.subr.mxu0 0.0
  %1357 = vmatpush1.msra.mxu0 0.0
  %1358 = vmatprep.subr.mxu0 0.0
  %1359 = vmatpush1.msra.mxu0 0.0
  %1360 = vmatprep.subr.mxu0 0.0
  %1361 = vmatpush1.msra.mxu0 0.0
  %1362 = vmatprep.subr.mxu0 0.0
  %1363 = vmatpush1.msra.mxu0 0.0
  %1364 = vmatprep.subr.mxu0 0.0
  %1365 = vmatpush1.msra.mxu0 0.0
  %1366 = vmatprep.subr.mxu0 0.0
  %1367 = vmatpush1.msra.mxu0 0.0
  %1368 = vmatprep.subr.mxu0 0.0
  %1369 = vmatpush1.msra.mxu0 0.0
  %1370 = vmatprep.subr.mxu0 0.0
  %1371 = vmatpush1.msra.mxu0 0.0
  %1372 = vmatprep.subr.mxu0 0.0
  %1373 = vmatpush1.msra.mxu0 0.0
  %1374 = vmatprep.subr.mxu0 0.0
  %1375 = vmatpush1.msra.mxu0 0.0
  %1376 = vmatprep.subr.mxu0 0.0
  %1377 = vmatpush1.msra.mxu0 0.0
  %1378 = vmatprep.subr.mxu0 0.0
  %1379 = vmatpush1.msra.mxu0 0.0
  %1380 = vmatprep.subr.mxu0 0.0
  %1381 = vmatpush1.msra.mxu0 0.0
  %1382 = vmatprep.subr.mxu0 0.0
  %1383 = vmatpush1.msra.mxu0 0.0
  %1384 = vmatprep.subr.mxu0 0.0
  %1385 = vmatpush1.msra.mxu0 0.0
  %1386 = vmatprep.subr.mxu0 0.0
  %1387 = vmatpush1.msra.mxu0 0.0
  %1388 = vmatprep.subr.mxu0 0.0
  %1389 = vmatpush1.msra.mxu0 0.0
  %1390 = vmatprep.subr.mxu0 0.0
  %1391 = vmatpush1.msra.mxu0 0.0
  %1392 = vmatprep.subr.mxu0 0.0
  %1393 = vmatpush1.msra.mxu0 0.0
  %1394 = vmatprep.subr.mxu0 0.0
  %1395 = vmatpush1.msra.mxu0 0.0
  %1396 = vmatprep.subr.mxu0 0.0
  %1397 = vmatpush1.msra.mxu0 0.0
  %1398 = vmatprep.subr.mxu0 0.0
  %1399 = vmatpush1.msra.mxu0 0.0
  %1400 = vmatprep.subr.mxu0 0.0
  %1401 = vmatpush1.msra.mxu0 0.0
  %1402 = vmatprep.mubr.f32.mxu0 0.0
  %1403 = vmatmul.mubr.f32.gmra.mrb[0].mxu0 %v1266
  %v1404 = vpop.f32.mrb[0].mxu0
  %v1405 = vadd.f32 0.0, %v1404
  %v1406 = vpop.f32.mrb[0].mxu0
  %1407 = vdwg.mxu0
  %v1408 = vrcp.pop %v1405
  %1410 = vset.pattern.permute.xlu0 0
  %1411 = vperm.xlu0 %1410, %v1408
  %v1412 = vpop.permute.xlu0 %1411
  %v1414 = vmul.f32 %v1335, %v1412
  %vm1415 = vcmask 254976
  %1416 = vst.msk [vmem:[#allocation2] sm:$0x3] %vm1415, %v555
  %1418 = vrot.lane.b32.xlu0 %v1031, 32
  %v1419 = vpop.permute.xlu0 %1418
  %vm1421 = vcmask 386304
  %1422 = vst.msk [vmem:[#allocation2] sm:$0x3] %vm1421, %v1419
  %1424 = vrot.lane.b32.xlu0 %v1414, 48
  %v1425 = vpop.permute.xlu0 %1424
  %vm1427 = vcmask 517504
  %1428 = vst.msk [vmem:[#allocation2] sm:$0x3] %vm1427, %v1425
  %1430 = vrot.lane.b32.xlu0 %v555, 64
  %v1431 = vpop.permute.xlu0 %1430
  %vm1433 = vcmask 781826
  %1434 = vst.msk [vmem:[#allocation2 - $0x2] sm:$0xc] %vm1433, %v1431
  %1435 = vrot.lane.b32.xlu0 %v1031, 96
  %v1436 = vpop.permute.xlu0 %1435
  %vm1438 = vcmask 913154
  %1439 = vst.msk [vmem:[#allocation2 - $0x2] sm:$0xc] %vm1438, %v1436
  %1440 = vrot.lane.b32.xlu0 %v1414, 112
  %v1441 = vpop.permute.xlu0 %1440
  %vm1443 = vcmask 1044354
  %1444 = vst.msk [vmem:[#allocation2 - $0x2] sm:$0xc] %vm1443, %v1441
  %v1445 = vld [vmem:[#allocation2] sm:$0x3]
  %v1446 = vld [vmem:[%s15] sm:$0xff]
  %v1447 = vld [vmem:[%s15 + $0x8] sm:$0xff]
  %v1448 = vld [vmem:[%s15 + $0x10] sm:$0xff]
  %v1449 = vld [vmem:[%s15 + $0x18] sm:$0xff]
  %v1450 = vld [vmem:[%s15 + $0x20] sm:$0xff]
  %v1451 = vld [vmem:[%s15 + $0x28] sm:$0xff]
  %v1452 = vld [vmem:[%s15 + $0x30] sm:$0xff]
  %v1453 = vld [vmem:[%s15 + $0x38] sm:$0xff]
  %v1454 = vld [vmem:[%s15 + $0x40] sm:$0xff]
  %v1455 = vld [vmem:[%s15 + $0x48] sm:$0xff]
  %v1456 = vld [vmem:[%s15 + $0x50] sm:$0xff]
  %v1457 = vld [vmem:[%s15 + $0x58] sm:$0xff]
  %v1458 = vld [vmem:[%s15 + $0x60] sm:$0xff]
  %v1459 = vld [vmem:[%s15 + $0x68] sm:$0xff]
  %v1460 = vld [vmem:[%s15 + $0x70] sm:$0xff]
  %v1461 = vld [vmem:[%s15 + $0x78] sm:$0xff]
  %v1462 = vld [vmem:[%s16] sm:$0x1]
  %v1464 = vlaneseq
  %v1465 = vshrl.u32 %v1464, 7
  %v1466 = vsub.s32 0, %v1465
  %v1467 = vrot.slane %v1462, %v1466
  %1469 = vmatprep.subr.mxu0 0.0
  %1470 = vmatpush1.msra.mxu0 %v1446
  %1471 = vmatprep.subr.mxu0 0.0
  %1472 = vmatpush1.msra.mxu0 %v1447
  %1473 = vmatprep.subr.mxu0 0.0
  %1474 = vmatpush1.msra.mxu0 %v1448
  %1475 = vmatprep.subr.mxu0 0.0
  %1476 = vmatpush1.msra.mxu0 %v1449
  %1477 = vmatprep.subr.mxu0 0.0
  %1478 = vmatpush1.msra.mxu0 %v1450
  %1479 = vmatprep.subr.mxu0 0.0
  %1480 = vmatpush1.msra.mxu0 %v1451
  %1481 = vmatprep.subr.mxu0 0.0
  %1482 = vmatpush1.msra.mxu0 %v1452
  %1483 = vmatprep.subr.mxu0 0.0
  %1484 = vmatpush1.msra.mxu0 %v1453
  %1485 = vmatprep.subr.mxu0 0.0
  %1486 = vmatpush1.msra.mxu0 %v1454
  %1487 = vmatprep.subr.mxu0 0.0
  %1488 = vmatpush1.msra.mxu0 %v1455
  %1489 = vmatprep.subr.mxu0 0.0
  %1490 = vmatpush1.msra.mxu0 %v1456
  %1491 = vmatprep.subr.mxu0 0.0
  %1492 = vmatpush1.msra.mxu0 %v1457
  %1493 = vmatprep.subr.mxu0 0.0
  %1494 = vmatpush1.msra.mxu0 %v1458
  %1495 = vmatprep.subr.mxu0 0.0
  %1496 = vmatpush1.msra.mxu0 %v1459
  %1497 = vmatprep.subr.mxu0 0.0
  %1498 = vmatpush1.msra.mxu0 %v1460
  %1499 = vmatprep.subr.mxu0 0.0
  %1500 = vmatpush1.msra.mxu0 %v1461
  %1501 = vmatprep.subr.mxu0 0.0
  %1502 = vmatpush1.msra.mxu0 0.0
  %1503 = vmatprep.subr.mxu0 0.0
  %1504 = vmatpush1.msra.mxu0 0.0
  %1505 = vmatprep.subr.mxu0 0.0
  %1506 = vmatpush1.msra.mxu0 0.0
  %1507 = vmatprep.subr.mxu0 0.0
  %1508 = vmatpush1.msra.mxu0 0.0
  %1509 = vmatprep.subr.mxu0 0.0
  %1510 = vmatpush1.msra.mxu0 0.0
  %1511 = vmatprep.subr.mxu0 0.0
  %1512 = vmatpush1.msra.mxu0 0.0
  %1513 = vmatprep.subr.mxu0 0.0
  %1514 = vmatpush1.msra.mxu0 0.0
  %1515 = vmatprep.subr.mxu0 0.0
  %1516 = vmatpush1.msra.mxu0 0.0
  %1517 = vmatprep.subr.mxu0 0.0
  %1518 = vmatpush1.msra.mxu0 0.0
  %1519 = vmatprep.subr.mxu0 0.0
  %1520 = vmatpush1.msra.mxu0 0.0
  %1521 = vmatprep.subr.mxu0 0.0
  %1522 = vmatpush1.msra.mxu0 0.0
  %1523 = vmatprep.subr.mxu0 0.0
  %1524 = vmatpush1.msra.mxu0 0.0
  %1525 = vmatprep.subr.mxu0 0.0
  %1526 = vmatpush1.msra.mxu0 0.0
  %1527 = vmatprep.subr.mxu0 0.0
  %1528 = vmatpush1.msra.mxu0 0.0
  %1529 = vmatprep.subr.mxu0 0.0
  %1530 = vmatpush1.msra.mxu0 0.0
  %1531 = vmatprep.subr.mxu0 0.0
  %1532 = vmatpush1.msra.mxu0 0.0
  %1533 = vmatprep.mubr.f32.mxu0 0.0
  %1534 = vmatmul.mubr.f32.gmra.mrb[0].mxu0 %v1445
  %v1535 = vpop.f32.mrb[0].mxu0
  %v1536 = vadd.f32 %v1467, %v1535
  %v1537 = vpop.f32.mrb[0].mxu0
  %1538 = vdwg.mxu0
  %vm1539 = vcmp.ge.f32.partialorder %v1536, 0.0
  %v1540 = vmul.f32 %v1536, 0.01
  %v1541 = vsel %vm1539, %v1536, %v1540
  %v1542 = vld [vmem:[%s17] sm:$0xff]
  %v1543 = vld [vmem:[%s17 + $0x8] sm:$0xff]
  %v1544 = vld [vmem:[%s17 + $0x10] sm:$0xff]
  %v1545 = vld [vmem:[%s17 + $0x18] sm:$0xff]
  %v1546 = vld [vmem:[%s17 + $0x20] sm:$0xff]
  %v1547 = vld [vmem:[%s17 + $0x28] sm:$0xff]
  %v1548 = vld [vmem:[%s17 + $0x30] sm:$0xff]
  %v1549 = vld [vmem:[%s17 + $0x38] sm:$0xff]
  %v1550 = vld [vmem:[%s17 + $0x40] sm:$0xff]
  %v1551 = vld [vmem:[%s17 + $0x48] sm:$0xff]
  %v1552 = vld [vmem:[%s17 + $0x50] sm:$0xff]
  %v1553 = vld [vmem:[%s17 + $0x58] sm:$0xff]
  %v1554 = vld [vmem:[%s17 + $0x60] sm:$0xff]
  %v1555 = vld [vmem:[%s17 + $0x68] sm:$0xff]
  %v1556 = vld [vmem:[%s17 + $0x70] sm:$0xff]
  %v1557 = vld [vmem:[%s17 + $0x78] sm:$0xff]
  %v1558 = vld [vmem:[%s18] sm:$0x1]
  %v1560 = vlaneseq
  %v1561 = vshrl.u32 %v1560, 7
  %v1562 = vsub.s32 0, %v1561
  %v1563 = vrot.slane %v1558, %v1562
  %1565 = vmatprep.subr.mxu0 0.0
  %1566 = vmatpush1.msra.mxu0 %v1542
  %1567 = vmatprep.subr.mxu0 0.0
  %1568 = vmatpush1.msra.mxu0 %v1543
  %1569 = vmatprep.subr.mxu0 0.0
  %1570 = vmatpush1.msra.mxu0 %v1544
  %1571 = vmatprep.subr.mxu0 0.0
  %1572 = vmatpush1.msra.mxu0 %v1545
  %1573 = vmatprep.subr.mxu0 0.0
  %1574 = vmatpush1.msra.mxu0 %v1546
  %1575 = vmatprep.subr.mxu0 0.0
  %1576 = vmatpush1.msra.mxu0 %v1547
  %1577 = vmatprep.subr.mxu0 0.0
  %1578 = vmatpush1.msra.mxu0 %v1548
  %1579 = vmatprep.subr.mxu0 0.0
  %1580 = vmatpush1.msra.mxu0 %v1549
  %1581 = vmatprep.subr.mxu0 0.0
  %1582 = vmatpush1.msra.mxu0 %v1550
  %1583 = vmatprep.subr.mxu0 0.0
  %1584 = vmatpush1.msra.mxu0 %v1551
  %1585 = vmatprep.subr.mxu0 0.0
  %1586 = vmatpush1.msra.mxu0 %v1552
  %1587 = vmatprep.subr.mxu0 0.0
  %1588 = vmatpush1.msra.mxu0 %v1553
  %1589 = vmatprep.subr.mxu0 0.0
  %1590 = vmatpush1.msra.mxu0 %v1554
  %1591 = vmatprep.subr.mxu0 0.0
  %1592 = vmatpush1.msra.mxu0 %v1555
  %1593 = vmatprep.subr.mxu0 0.0
  %1594 = vmatpush1.msra.mxu0 %v1556
  %1595 = vmatprep.subr.mxu0 0.0
  %1596 = vmatpush1.msra.mxu0 %v1557
  %1597 = vmatprep.subr.mxu0 0.0
  %1598 = vmatpush1.msra.mxu0 0.0
  %1599 = vmatprep.subr.mxu0 0.0
  %1600 = vmatpush1.msra.mxu0 0.0
  %1601 = vmatprep.subr.mxu0 0.0
  %1602 = vmatpush1.msra.mxu0 0.0
  %1603 = vmatprep.subr.mxu0 0.0
  %1604 = vmatpush1.msra.mxu0 0.0
  %1605 = vmatprep.subr.mxu0 0.0
  %1606 = vmatpush1.msra.mxu0 0.0
  %1607 = vmatprep.subr.mxu0 0.0
  %1608 = vmatpush1.msra.mxu0 0.0
  %1609 = vmatprep.subr.mxu0 0.0
  %1610 = vmatpush1.msra.mxu0 0.0
  %1611 = vmatprep.subr.mxu0 0.0
  %1612 = vmatpush1.msra.mxu0 0.0
  %1613 = vmatprep.subr.mxu0 0.0
  %1614 = vmatpush1.msra.mxu0 0.0
  %1615 = vmatprep.subr.mxu0 0.0
  %1616 = vmatpush1.msra.mxu0 0.0
  %1617 = vmatprep.subr.mxu0 0.0
  %1618 = vmatpush1.msra.mxu0 0.0
  %1619 = vmatprep.subr.mxu0 0.0
  %1620 = vmatpush1.msra.mxu0 0.0
  %1621 = vmatprep.subr.mxu0 0.0
  %1622 = vmatpush1.msra.mxu0 0.0
  %1623 = vmatprep.subr.mxu0 0.0
  %1624 = vmatpush1.msra.mxu0 0.0
  %1625 = vmatprep.subr.mxu0 0.0
  %1626 = vmatpush1.msra.mxu0 0.0
  %1627 = vmatprep.subr.mxu0 0.0
  %1628 = vmatpush1.msra.mxu0 0.0
  %1629 = vmatprep.mubr.f32.mxu0 0.0
  %1630 = vmatmul.mubr.f32.gmra.mrb[0].mxu0 %v1541
  %v1631 = vpop.f32.mrb[0].mxu0
  %v1632 = vadd.f32 %v1563, %v1631
  %v1633 = vpop.f32.mrb[0].mxu0
  %1634 = vdwg.mxu0
  %vm1635 = vcmp.ge.f32.partialorder %v1632, 0.0
  %v1636 = vmul.f32 %v1632, 0.01
  %v1637 = vsel %vm1635, %v1632, %v1636
  %v1638 = vld [vmem:[%s19] sm:$0x1]
  %v1640 = vlaneseq
  %v1641 = vshrl.u32 %v1640, 7
  %v1642 = vsub.s32 0, %v1641
  %v1643 = vrot.slane %v1638, %v1642
  %v1645 = vmul.f32 %v1637, %v1643
  %vm1646 = vcmask 517120
  %v1647 = vsel %vm1646, %v1645, 0.0
  %1648 = vadd.xlane.f32.xlu0 %v1647
  %v1649 = vpop.xlane.xlu0 %1648
  %s1650 = sld [smem:[#allocation3]]
  %v1651 = vstv %s1650
  %v1652 = vadd.f32 %v1649, %v1651
  %v1653 = vsub.f32 0.0, %v1652
  %v1654 = vmul.f32 %v1653, 1.442695
  %v1655 = vpow.pop %v1654
  %v1656 = vadd.f32 %v1655, 1.0
  %v1657 = vrcp.pop %v1656
  %vm1658 = vcmask 1024
  %1659 = vst.msk [vmem:[%s21] sm:$0x3] %vm1658, %v1657
  // Predicated region
  $region86: #{tpu_custom_call.1} parent=0 // pred_check
    _
  $region87: #{tpu_custom_call.1} parent=0 // pred_check_branch
    %1661 = sbr.rel (0) target = $region89
  $region88: #{tpu_custom_call.1} parent=0 // pred_region
    _
  $region89: #{tpu_custom_call.1} parent=0 // pred_fallthru
    _
  // Predicated region
  $region90: #{tpu_custom_call.1} parent=0 // pred_check
    _
  $region91: #{tpu_custom_call.1} parent=0 // pred_check_branch
    %1663 = sbr.rel (0) target = $region93
  $region92: #{tpu_custom_call.1} parent=0 // pred_region
    _
  $region93: #{tpu_custom_call.1} parent=0 // pred_fallthru
    _

</llo_original>
